<compile_context>
chip_gen: v6e
topology: v6e:2x2x1
jax: 0.10.0
libtpu: 0.0.40
codegen_flags: <defaults>
</compile_context>

<pallas_src>
import functools

import jax
import jax.numpy as jnp
from jax.experimental import pallas as pl
from jax.experimental.pallas import tpu as pltpu


def _conv_block_kernel(x_ref, w_ref, b_ref, o_ref, *,
                       KH, KW, OH, OW, stride, neg_slope):
    """One grid step = `nb` whole padded images -> `nb` whole output images.

    x_ref: (nb, Hp, Wp, C)   compute dtype (bf16 default) -- loaded once
    w_ref: (KH*KW*C, O)      compute dtype -- resident (constant index_map)
    b_ref: (1, O)            f32
    o_ref: (nb, OH, OW, O)   out dtype
    """
    x = x_ref[...]
    nb = x.shape[0]
    C = x.shape[-1]

    # Fused in-VMEM im2col: KH*KW shifted taps concatenated along the lane (C) axis.
    taps = []
    for kh in range(KH):                           # static unroll
        h_lim = kh + (OH - 1) * stride + 1
        for kw in range(KW):
            w_lim = kw + (OW - 1) * stride + 1
            taps.append(x[:, kh:h_lim:stride, kw:w_lim:stride, :])   # (nb, OH, OW, C)
    patches = jnp.concatenate(taps, axis=-1)       # (nb, OH, OW, KH*KW*C), VMEM only
    a = patches.reshape(nb * OH * OW, KH * KW * C)

    # Single MXU matmul for the whole block; f32 accumulation, bias + LeakyReLU fused.
    y = jnp.dot(a, w_ref[...], preferred_element_type=jnp.float32)   # (M, O)
    y = y + b_ref[...]
    y = jnp.where(y >= 0, y, neg_slope * y)        # LeakyReLU(negative_slope=0.01)
    o_ref[...] = y.reshape(o_ref.shape).astype(o_ref.dtype)


def _vmem_plan():
    """(vmem_limit_bytes, block_budget_bytes) per TPU generation."""
    kind = ""
    try:
        kind = jax.devices()[0].device_kind.lower()
    except Exception:
        pass
    if "v7" in kind or "7x" in kind:               # v7x: 64 MiB VMEM per TensorCore
        return 48 * 1024 * 1024, 16 * 1024 * 1024
    return 96 * 1024 * 1024, 28 * 1024 * 1024      # v4/v5e/v6e: 128 MiB per TensorCore


def _pick_batch_block(N, Hp, Wp, C, OH, OW, O, KH, KW,
                      in_itemsize, out_itemsize, budget_bytes):
    """Largest divisor of N whose whole-image blocks fit the VMEM budget, while
    keeping >= 2 grid steps (v7x megacore balance / pipeline overlap) when N >= 2."""
    K = KH * KW * C

    def need(nb):
        x_blk = 2 * nb * Hp * Wp * C * in_itemsize          # double-buffered input
        o_blk = 2 * nb * OH * OW * O * out_itemsize         # double-buffered output
        w_res = K * O * in_itemsize + O * 4                 # resident weight + bias
        tmp = (2 * nb * OH * OW * K * in_itemsize           # taps + patch matrix
               + 2 * nb * OH * OW * O * 4)                  # f32 result + activation
        return x_blk + o_blk + w_res + tmp

    best = 1
    for nb in range(1, N + 1):
        if N % nb:
            continue
        if N >= 2 and N // nb < 2:
            continue                                        # keep >= 2 parallel steps
        if need(nb) <= budget_bytes:
            best = nb
    return best


def conv_layer_forward(x, weight, bias, *, stride=1, padding=0, neg_slope=0.01,
                       compute_dtype=jnp.bfloat16, out_dtype=jnp.float32,
                       out_format="NCHW"):
    """ConvLayer forward: Conv2d(stride, padding, bias=True) + LeakyReLU.

    x:      (N, C, H, W)   float32, NCHW (PyTorch convention)
    weight: (O, C, KH, KW) float32
    bias:   (O,)           float32
    returns (N, O, OH, OW) in out_dtype (or NHWC if out_format="NHWC")
    """
    N, C, H, W = x.shape
    O, _, KH, KW = weight.shape

    # NCHW -> NHWC (lane-dense channels) + cast + zero-pad: one fused XLA pass.
    x_nhwc = jnp.transpose(x, (0, 2, 3, 1)).astype(compute_dtype)
    if padding > 0:
        x_nhwc = jnp.pad(
            x_nhwc, ((0, 0), (padding, padding), (padding, padding), (0, 0)))
    Hp, Wp = H + 2 * padding, W + 2 * padding
    OH = (Hp - KH) // stride + 1
    OW = (Wp - KW) // stride + 1

    # weight (O, C, KH, KW) -> (KH*KW*C, O) matching the in-kernel tap concat order.
    w2 = jnp.transpose(weight, (2, 3, 1, 0)).reshape(KH * KW * C, O).astype(compute_dtype)
    b2 = bias.reshape(1, O).astype(jnp.float32)

    vmem_limit, budget = _vmem_plan()
    nb = _pick_batch_block(N, Hp, Wp, C, OH, OW, O, KH, KW,
                           jnp.dtype(compute_dtype).itemsize,
                           jnp.dtype(out_dtype).itemsize, budget)
    grid = (N // nb,)

    kernel = functools.partial(_conv_block_kernel, KH=KH, KW=KW, OH=OH, OW=OW,
                               stride=stride, neg_slope=neg_slope)

    # Accurate traffic: input read once, weight/bias once, output written once.
    cost = pl.CostEstimate(
        flops=2 * N * OH * OW * KH * KW * C * O,
        transcendentals=0,
        bytes_accessed=(x_nhwc.size * x_nhwc.dtype.itemsize
                        + w2.size * w2.dtype.itemsize + b2.size * 4
                        + N * OH * OW * O * jnp.dtype(out_dtype).itemsize),
    )

    out_nhwc = pl.pallas_call(
        kernel,
        out_shape=jax.ShapeDtypeStruct((N, OH, OW, O), out_dtype),
        grid_spec=pltpu.PrefetchScalarGridSpec(
            num_scalar_prefetch=0,
            grid=grid,
            in_specs=[
                # Whole padded image block: each image is DMA'd exactly once.
                pl.BlockSpec((nb, Hp, Wp, C), lambda i: (i, 0, 0, 0)),
                # Constant block index -> weight resident in VMEM, never re-DMA'd.
                pl.BlockSpec((KH * KW * C, O), lambda i: (0, 0)),
                pl.BlockSpec((1, O), lambda i: (0, 0)),
            ],
            out_specs=pl.BlockSpec((nb, OH, OW, O), lambda i: (i, 0, 0, 0)),
        ),
        compiler_params=pltpu.CompilerParams(
            dimension_semantics=("parallel",),
            vmem_limit_bytes=vmem_limit,
        ),
        cost_estimate=cost,
    )(x_nhwc, w2, b2)

    if out_format == "NHWC":
        return out_nhwc
    # NCHW for PyTorch parity (elide by consuming NHWC directly in a full network).
    return jnp.transpose(out_nhwc, (0, 3, 1, 2))


def _reference(x, weight, bias, stride, padding, neg_slope):
    y = jax.lax.conv_general_dilated(
        x, weight, window_strides=(stride, stride),
        padding=[(padding, padding), (padding, padding)],
        dimension_numbers=("NCHW", "OIHW", "NCHW"))
    y = y + bias.reshape(1, -1, 1, 1)
    return jnp.where(y >= 0, y, neg_slope * y)


if __name__ == "__main__":
    key = jax.random.PRNGKey(0)
    k1, k2, k3 = jax.random.split(key, 3)

    N, C, H, W = 2, 4, 16, 16
    O, KH, KW = 8, 3, 3

    x = jax.random.normal(k1, (N, C, H, W), dtype=jnp.float32)
    weight = jax.random.normal(k2, (O, C, KH, KW), dtype=jnp.float32) * 0.1
    bias = jax.random.normal(k3, (O,), dtype=jnp.float32) * 0.1

    # bf16 MXU path (default).
    for stride, padding in [(1, 0), (1, 1)]:
        out = conv_layer_forward(x, weight, bias, stride=stride, padding=padding)
        out = jax.block_until_ready(out)
        ref = _reference(x, weight, bias, stride, padding, 0.01)
        assert out.shape == ref.shape, (out.shape, ref.shape)
        err = float(jnp.max(jnp.abs(out - ref)))
        assert jnp.allclose(out, ref, atol=3e-2, rtol=3e-2), err

    # f32 opt-out path for precision-sensitive layers.
    out32 = conv_layer_forward(x, weight, bias, stride=1, padding=1,
                               compute_dtype=jnp.float32)
    out32 = jax.block_until_ready(out32)
    ref32 = _reference(x, weight, bias, 1, 1, 0.01)
    err32 = float(jnp.max(jnp.abs(out32 - ref32)))
    assert jnp.allclose(out32, ref32, atol=5e-3, rtol=5e-3), err32

    print("KERNEL_OK")
</pallas_src>

<mosaic_0001>
module attributes {stable_mosaic.version = 11 : i64} {
  func.func @_conv_block_kernel(%arg0: i32, %arg1: memref<1x16x16x4xbf16, #tpu.memory_space<vmem>>, %arg2: memref<36x8xbf16, #tpu.memory_space<vmem>>, %arg3: memref<1x8xf32, #tpu.memory_space<vmem>>, %arg4: memref<1x14x14x8xf32, #tpu.memory_space<vmem>>) attributes {dimension_semantics = [#tpu.dimension_semantics<parallel>], iteration_bounds = array<i64: 2>, scalar_prefetch = 0 : i64, scratch_operands = 0 : i64, tpu.core_type = #tpu.core_type<tc>, window_params = [{transform_indices = @transform_0, window_bounds = array<i64: 1, 16, 16, 4>}, {pipeline_mode = #tpu.pipeline_mode<synchronous>, transform_indices = @transform_1, window_bounds = array<i64: 36, 8>}, {pipeline_mode = #tpu.pipeline_mode<synchronous>, transform_indices = @transform_2, window_bounds = array<i64: 1, 8>}, {transform_indices = @transform_3, window_bounds = array<i64: 1, 14, 14, 8>}]} {
    %c0 = arith.constant 0 : index
    %c0_0 = arith.constant 0 : index
    %c0_1 = arith.constant 0 : index
    %c0_2 = arith.constant 0 : index
    %0 = vector.load %arg1[%c0, %c0_0, %c0_1, %c0_2] : memref<1x16x16x4xbf16, #tpu.memory_space<vmem>>, vector<1x16x16x4xbf16>
    %1 = vector.extract_strided_slice %0 {offsets = [0, 0, 0, 0], sizes = [1, 14, 14, 4], strides = [1, 1, 1, 1]} : vector<1x16x16x4xbf16> to vector<1x14x14x4xbf16>
    %2 = vector.extract_strided_slice %0 {offsets = [0, 0, 1, 0], sizes = [1, 14, 14, 4], strides = [1, 1, 1, 1]} : vector<1x16x16x4xbf16> to vector<1x14x14x4xbf16>
    %3 = vector.extract_strided_slice %0 {offsets = [0, 0, 2, 0], sizes = [1, 14, 14, 4], strides = [1, 1, 1, 1]} : vector<1x16x16x4xbf16> to vector<1x14x14x4xbf16>
    %4 = vector.extract_strided_slice %0 {offsets = [0, 1, 0, 0], sizes = [1, 14, 14, 4], strides = [1, 1, 1, 1]} : vector<1x16x16x4xbf16> to vector<1x14x14x4xbf16>
    %5 = vector.extract_strided_slice %0 {offsets = [0, 1, 1, 0], sizes = [1, 14, 14, 4], strides = [1, 1, 1, 1]} : vector<1x16x16x4xbf16> to vector<1x14x14x4xbf16>
    %6 = vector.extract_strided_slice %0 {offsets = [0, 1, 2, 0], sizes = [1, 14, 14, 4], strides = [1, 1, 1, 1]} : vector<1x16x16x4xbf16> to vector<1x14x14x4xbf16>
    %7 = vector.extract_strided_slice %0 {offsets = [0, 2, 0, 0], sizes = [1, 14, 14, 4], strides = [1, 1, 1, 1]} : vector<1x16x16x4xbf16> to vector<1x14x14x4xbf16>
    %8 = vector.extract_strided_slice %0 {offsets = [0, 2, 1, 0], sizes = [1, 14, 14, 4], strides = [1, 1, 1, 1]} : vector<1x16x16x4xbf16> to vector<1x14x14x4xbf16>
    %9 = vector.extract_strided_slice %0 {offsets = [0, 2, 2, 0], sizes = [1, 14, 14, 4], strides = [1, 1, 1, 1]} : vector<1x16x16x4xbf16> to vector<1x14x14x4xbf16>
    %10 = tpu.concatenate %1, %2, %3, %4, %5, %6, %7, %8, %9 in 3 : vector<1x14x14x4xbf16>, vector<1x14x14x4xbf16>, vector<1x14x14x4xbf16>, vector<1x14x14x4xbf16>, vector<1x14x14x4xbf16>, vector<1x14x14x4xbf16>, vector<1x14x14x4xbf16>, vector<1x14x14x4xbf16>, vector<1x14x14x4xbf16> -> vector<1x14x14x36xbf16>
    %11 = vector.shape_cast %10 : vector<1x14x14x36xbf16> to vector<196x36xbf16>
    %c0_3 = arith.constant 0 : index
    %c0_4 = arith.constant 0 : index
    %12 = vector.load %arg2[%c0_3, %c0_4] : memref<36x8xbf16, #tpu.memory_space<vmem>>, vector<36x8xbf16>
    %cst = arith.constant dense<0.000000e+00> : vector<196x8xf32>
    %13 = tpu.matmul %11, %12, %cst {dimension_numbers = #tpu.dot_dimension_numbers<[1], [0], [0], [1], [0, 0, 1, 1], [], []>} : vector<196x36xbf16>, vector<36x8xbf16>, vector<196x8xf32> -> vector<196x8xf32>
    %c0_5 = arith.constant 0 : index
    %c0_6 = arith.constant 0 : index
    %14 = vector.load %arg3[%c0_5, %c0_6] : memref<1x8xf32, #tpu.memory_space<vmem>>, vector<1x8xf32>
    %15 = vector.broadcast %14 : vector<1x8xf32> to vector<196x8xf32>
    %16 = arith.addf %13, %15 : vector<196x8xf32>
    %cst_7 = arith.constant 0.000000e+00 : f32
    %17 = vector.broadcast %cst_7 : f32 to vector<196x8xf32>
    %18 = arith.cmpf oge, %16, %17 : vector<196x8xf32>
    %cst_8 = arith.constant 0.00999999977 : f32
    %19 = vector.broadcast %cst_8 : f32 to vector<196x8xf32>
    %20 = arith.mulf %19, %16 : vector<196x8xf32>
    %21 = arith.select %18, %16, %20 : vector<196x8xi1>, vector<196x8xf32>
    %22 = vector.shape_cast %21 : vector<196x8xf32> to vector<1x14x14x8xf32>
    %c0_9 = arith.constant 0 : index
    %c0_10 = arith.constant 0 : index
    %c0_11 = arith.constant 0 : index
    %c0_12 = arith.constant 0 : index
    %23 = vector.load %arg4[%c0_9, %c0_10, %c0_11, %c0_12] : memref<1x14x14x8xf32, #tpu.memory_space<vmem>>, vector<1x14x14x8xf32>
    tpu.vector_store %arg4[%c0_9, %c0_10, %c0_11, %c0_12], %22 {strides = array<i32>} : memref<1x14x14x8xf32, #tpu.memory_space<vmem>>, vector<1x14x14x8xf32>,
    return
  }
  func.func @transform_0(%arg0: i32) -> (i32, i32, i32, i32) {
    %c0_i32 = arith.constant 0 : i32
    %c0_i32_0 = arith.constant 0 : i32
    %c0_i32_1 = arith.constant 0 : i32
    %c0_i32_2 = arith.constant 0 : i32
    return %arg0, %c0_i32, %c0_i32_0, %c0_i32_1 : i32, i32, i32, i32
  }
  func.func @transform_1(%arg0: i32) -> (i32, i32) {
    %c0_i32 = arith.constant 0 : i32
    %c0_i32_0 = arith.constant 0 : i32
    %c0_i32_1 = arith.constant 0 : i32
    return %c0_i32, %c0_i32_0 : i32, i32
  }
  func.func @transform_2(%arg0: i32) -> (i32, i32) {
    %c0_i32 = arith.constant 0 : i32
    %c0_i32_0 = arith.constant 0 : i32
    %c0_i32_1 = arith.constant 0 : i32
    return %c0_i32, %c0_i32_0 : i32, i32
  }
  func.func @transform_3(%arg0: i32) -> (i32, i32, i32, i32) {
    %c0_i32 = arith.constant 0 : i32
    %c0_i32_0 = arith.constant 0 : i32
    %c0_i32_1 = arith.constant 0 : i32
    %c0_i32_2 = arith.constant 0 : i32
    return %arg0, %c0_i32, %c0_i32_0, %c0_i32_1 : i32, i32, i32, i32
  }
}

</mosaic_0001>

<llo_original>
// kernel: tpu_custom_call.1
$region0: #{tpu_custom_call.1}
  #allocation0 [shape = 'u32[]', space=smem, size = 0x4, offset = 0x4, fixed_abs, tag = 'smem constant byte address 0x4 - core index']
  #allocation1 [shape = 'u32[144,128]{1,0:T(1,128)}', space=vmem, size = 0x12000, scoped, tag = 'internal scratch']
  %s0 = inlined_call_operand.vmem [shape: bf16[2,16,16,4], index: 0, kind: input, shape index: {}]
  %s1 = inlined_call_operand.vmem [shape: bf16[36,8], index: 1, kind: input, shape index: {}]
  %s2 = inlined_call_operand.vmem [shape: f32[1,8], index: 2, kind: input, shape index: {}]
  %s3 = inlined_call_operand.vmem [shape: f32[2,14,14,8], index: 3, kind: output, shape index: {}]
  %s4 = sld [smem:[#allocation0]]
  $region45: #{tpu_custom_call.1} parent=0
    _
  %s6 = ssub.s32 1, %s4
  %s7 = scalar_select 0, %s6, %s4
  loop: start=0, step=1, limit=4
  $region2: #{tpu_custom_call.1} parent=0 // loop_pre_header
    _
  $region3: #{tpu_custom_call.1} parent=0 // loop_header
    %s9 = sphi 0, %s13
    %p10 = scmp.ge.s32.totalorder %s9, 4
    %s19 = sphi 0, %s21
    %s22 = sphi 0, %s19
    %s23 = sphi 0, %s22
    %s39 = sphi 0, %s23
    %s43 = sphi 0, %s43
    %s45 = sphi 0, %s43
    %s46 = sphi 0, %s45
    %s60 = sphi 0, %s46
    %s64 = sphi 0, %s64
    %s66 = sphi 0, %s64
    %s67 = sphi 0, %s66
    %s81 = sphi 0, %s67
    %s87 = sphi 0, %s89
    %s90 = sphi 0, %s87
    %s91 = sphi 0, %s90
    %s107 = sphi 0, %s91
  $region4: #{tpu_custom_call.1} parent=0 // loop_header_branch
    %12 = sbr.rel (%p10) target = $region8
  $region5: #{tpu_custom_call.1} parent=0 // loop_body
    %s14 = ssub.s32 %s9, 1
    %s15 = ssub.s32 %s9, 2
    %s16 = sadd.s32 %s9, 1
    %s17 = ssub.s32 %s9, %s16
    %p18 = scmp.eq.s32.totalorder %s17, 0
    %s20 = sadd.s32 %s19, 1
    %s21 = scalar_select %p18, %s19, %s20
    %p24 = pneg %p18
    %p25 = scmp.eq.s32.totalorder %s9, 1
    %p26 = por %p24, %p25
    %p27 = scmp.ne.s32.totalorder %s19, %s22
    %p28 = scmp.eq.s32.totalorder %s9, 0
    %p29 = por %p27, %p28
    %p30 = scmp.ne.s32.totalorder %s19, %s22
    %p31 = scmp.eq.s32.totalorder %s14, 1
    %p32 = por %p30, %p31
    %p33 = scmp.ne.s32.totalorder %s22, %s23
    %p34 = scmp.eq.s32.totalorder %s14, 0
    %p35 = por %p33, %p34
    %p36 = scmp.ne.s32.totalorder %s22, %s23
    %p37 = scmp.eq.s32.totalorder %s15, 1
    %p38 = por %p36, %p37
    %p40 = scmp.ne.s32.totalorder %s23, %s39
    %p41 = scmp.eq.s32.totalorder %s15, 0
    %p42 = por %p40, %p41
    %s44 = sadd.s32 %s43, 1
    %p47 = scmp.eq.s32.totalorder %s9, 1
    %p48 = scmp.ne.s32.totalorder %s43, %s45
    %p49 = scmp.eq.s32.totalorder %s9, 0
    %p50 = por %p48, %p49
    %p51 = scmp.ne.s32.totalorder %s43, %s45
    %p52 = scmp.eq.s32.totalorder %s14, 1
    %p53 = por %p51, %p52
    %p54 = scmp.ne.s32.totalorder %s45, %s46
    %p55 = scmp.eq.s32.totalorder %s14, 0
    %p56 = por %p54, %p55
    %p57 = scmp.ne.s32.totalorder %s45, %s46
    %p58 = scmp.eq.s32.totalorder %s15, 1
    %p59 = por %p57, %p58
    %p61 = scmp.ne.s32.totalorder %s46, %s60
    %p62 = scmp.eq.s32.totalorder %s15, 0
    %p63 = por %p61, %p62
    %s65 = sadd.s32 %s64, 1
    %p68 = scmp.eq.s32.totalorder %s9, 1
    %p69 = scmp.ne.s32.totalorder %s64, %s66
    %p70 = scmp.eq.s32.totalorder %s9, 0
    %p71 = por %p69, %p70
    %p72 = scmp.ne.s32.totalorder %s64, %s66
    %p73 = scmp.eq.s32.totalorder %s14, 1
    %p74 = por %p72, %p73
    %p75 = scmp.ne.s32.totalorder %s66, %s67
    %p76 = scmp.eq.s32.totalorder %s14, 0
    %p77 = por %p75, %p76
    %p78 = scmp.ne.s32.totalorder %s66, %s67
    %p79 = scmp.eq.s32.totalorder %s15, 1
    %p80 = por %p78, %p79
    %p82 = scmp.ne.s32.totalorder %s67, %s81
    %p83 = scmp.eq.s32.totalorder %s15, 0
    %p84 = por %p82, %p83
    %s85 = ssub.s32 %s9, %s16
    %p86 = scmp.eq.s32.totalorder %s85, 0
    %s88 = sadd.s32 %s87, 1
    %s89 = scalar_select %p86, %s87, %s88
    %p92 = pneg %p86
    %p93 = scmp.eq.s32.totalorder %s9, 1
    %p94 = por %p92, %p93
    %p95 = scmp.ne.s32.totalorder %s87, %s90
    %p96 = scmp.eq.s32.totalorder %s9, 0
    %p97 = por %p95, %p96
    %p98 = scmp.ne.s32.totalorder %s87, %s90
    %p99 = scmp.eq.s32.totalorder %s14, 1
    %p100 = por %p98, %p99
    %p101 = scmp.ne.s32.totalorder %s90, %s91
    %p102 = scmp.eq.s32.totalorder %s14, 0
    %p103 = por %p101, %p102
    %p104 = scmp.ne.s32.totalorder %s90, %s91
    %p105 = scmp.eq.s32.totalorder %s15, 1
    %p106 = por %p104, %p105
    %p108 = scmp.ne.s32.totalorder %s91, %s107
    %p109 = scmp.eq.s32.totalorder %s15, 0
    %p110 = por %p108, %p109
    %p111 = scmp.le.s32.totalorder 1, %s9
    %p112 = scmp.lt.s32.totalorder %s9, 3
    %p113 = pnand %p111, %p112
    %p114 = pneg %p113
    // Predicated region
    $region9: #{tpu_custom_call.1} parent=5 // pred_check
      _
    $region10: #{tpu_custom_call.1} parent=5 // pred_check_branch
      %116 = sbr.rel (%p113) target = $region12
    $region11: #{tpu_custom_call.1} parent=5 // pred_region
      %s117 = ssub.s32 %s9, 1
      // Predicated region
      $region13: #{tpu_custom_call.1} parent=11 // pred_check
        %p118 = pneg %p56
      $region14: #{tpu_custom_call.1} parent=11 // pred_check_branch
        %120 = sbr.rel (%p118) target = $region16
      $region15: #{tpu_custom_call.1} parent=11 // pred_region
        _
      $region16: #{tpu_custom_call.1} parent=11 // pred_fallthru
        _
      // Predicated region
      $region17: #{tpu_custom_call.1} parent=11 // pred_check
        %p121 = pneg %p77
      $region18: #{tpu_custom_call.1} parent=11 // pred_check_branch
        %123 = sbr.rel (%p121) target = $region20
      $region19: #{tpu_custom_call.1} parent=11 // pred_region
        _
      $region20: #{tpu_custom_call.1} parent=11 // pred_fallthru
        _
    $region12: #{tpu_custom_call.1} parent=5 // pred_fallthru
      _
    %p124 = scmp.lt.s32.totalorder %s9, 2
    // Predicated region
    $region21: #{tpu_custom_call.1} parent=5 // pred_check
      %p125 = pneg %p124
    $region22: #{tpu_custom_call.1} parent=5 // pred_check_branch
      %127 = sbr.rel (%p125) target = $region24
    $region23: #{tpu_custom_call.1} parent=5 // pred_region
      // Predicated region
      $region25: #{tpu_custom_call.1} parent=23 // pred_check
        %p128 = pneg %p29
      $region26: #{tpu_custom_call.1} parent=23 // pred_check_branch
        %130 = sbr.rel (%p128) target = $region28
      $region27: #{tpu_custom_call.1} parent=23 // pred_region
        %p131 = scmp.lt.s32.totalorder %s9, 1
        %s132 = scalar_select %p131, %s9, 1
        %s133 = smul.addr %s132, 32
        %s134 = smul.addr %s133, 4
        %s135 = scalar_lea.vmem %s0, %s134
      $region28: #{tpu_custom_call.1} parent=23 // pred_fallthru
        _
    $region24: #{tpu_custom_call.1} parent=5 // pred_fallthru
      _
    %p136 = scmp.le.s32.totalorder 1, %s9
    %p137 = scmp.lt.s32.totalorder %s9, 3
    %p138 = pnand %p136, %p137
    %p139 = pneg %p138
    // Predicated region
    $region29: #{tpu_custom_call.1} parent=5 // pred_check
      _
    $region30: #{tpu_custom_call.1} parent=5 // pred_check_branch
      %141 = sbr.rel (%p138) target = $region32
    $region31: #{tpu_custom_call.1} parent=5 // pred_region
      %s142 = ssub.s32 %s9, 1
      %p143 = scmp.lt.s32.totalorder %s14, 1
      %s144 = scalar_select %p143, %s14, 1
      %s145 = smul.addr %s144, 32
      %s146 = smul.addr %s145, 4
      %s147 = scalar_lea.vmem %s0, %s146
      %p148 = pneg %p35
      %p149 = pneg %p32
      %p150 = pneg %p56
      %p151 = pneg %p53
      %p152 = pneg %p77
      %p153 = pneg %p74
      %p154 = pneg %p103
      %p155 = pneg %p100
      %p156 = scmp.lt.s32.totalorder %s14, 1
      %s157 = scalar_select %p156, %s14, 1
      %s158 = smul.addr %s157, 28
      %s159 = smul.addr %s158, 8
      %s160 = scalar_lea.vmem %s3, %s159
      %p161 = scmp.lt.s32.totalorder %s14, 1
      %s162 = scalar_select %p161, %s14, 1
      %s163 = smul.addr %s162, 32
      %s164 = smul.addr %s163, 4
      %s165 = scalar_lea.vmem %s0, %s164
      %p166 = scmp.lt.s32.totalorder %s14, 1
      %s167 = scalar_select %p166, %s14, 1
      %s168 = smul.addr %s167, 28
      %s169 = smul.addr %s168, 8
      %s170 = scalar_lea.vmem %s3, %s169
      %v172 = vld [vmem:[%s165] sm:$0xf]
      %v173 = vld [vmem:[%s165 + $0x4] sm:$0xf]
      %v174 = vld [vmem:[%s165 + $0x8] sm:$0xf]
      %v175 = vld [vmem:[%s165 + $0xc] sm:$0xf]
      %v176 = vld [vmem:[%s165 + $0x10] sm:$0xf]
      %v177 = vld [vmem:[%s165 + $0x14] sm:$0xf]
      %v178 = vld [vmem:[%s165 + $0x18] sm:$0xf]
      %v179 = vld [vmem:[%s165 + $0x1c] sm:$0xf]
      %v180 = vld [vmem:[%s165 + $0x20] sm:$0xf]
      %v181 = vld [vmem:[%s165 + $0x24] sm:$0xf]
      %v182 = vld [vmem:[%s165 + $0x28] sm:$0xf]
      %v183 = vld [vmem:[%s165 + $0x2c] sm:$0xf]
      %v184 = vld [vmem:[%s165 + $0x30] sm:$0xf]
      %v185 = vld [vmem:[%s165 + $0x34] sm:$0xf]
      %v186 = vld [vmem:[%s165 + $0x38] sm:$0xf]
      %v187 = vld [vmem:[%s165 + $0x3c] sm:$0xf]
      %v188 = vld [vmem:[%s165 + $0x40] sm:$0xf]
      %v189 = vld [vmem:[%s165 + $0x44] sm:$0xf]
      %v190 = vld [vmem:[%s165 + $0x48] sm:$0xf]
      %v191 = vld [vmem:[%s165 + $0x4c] sm:$0xf]
      %v192 = vld [vmem:[%s165 + $0x50] sm:$0xf]
      %v193 = vld [vmem:[%s165 + $0x54] sm:$0xf]
      %v194 = vld [vmem:[%s165 + $0x58] sm:$0xf]
      %v195 = vld [vmem:[%s165 + $0x5c] sm:$0xf]
      %v196 = vld [vmem:[%s165 + $0x60] sm:$0xf]
      %v197 = vld [vmem:[%s165 + $0x64] sm:$0xf]
      %v198 = vld [vmem:[%s165 + $0x68] sm:$0xf]
      %v199 = vld [vmem:[%s165 + $0x6c] sm:$0xf]
      %v200 = vld [vmem:[%s165 + $0x70] sm:$0xf]
      %v201 = vld [vmem:[%s165 + $0x74] sm:$0xf]
      %v202 = vld [vmem:[%s165 + $0x78] sm:$0xf]
      %v203 = vld [vmem:[%s165 + $0x7c] sm:$0xf]
      %v232 = vunpack.c.l.b16 %v172
      %v233 = vunpack.c.l.b16 %v173
      %v234 = vunpack.c.l.b16 %v174
      %v235 = vunpack.c.l.b16 %v175
      %v236 = vunpack.c.l.b16 %v176
      %v237 = vunpack.c.l.b16 %v177
      %v238 = vunpack.c.l.b16 %v178
      %v239 = vunpack.c.l.b16 %v179
      %v240 = vunpack.c.l.b16 %v180
      %v241 = vunpack.c.l.b16 %v181
      %v242 = vunpack.c.l.b16 %v182
      %v243 = vunpack.c.l.b16 %v183
      %v244 = vunpack.c.l.b16 %v184
      %v245 = vunpack.c.l.b16 %v185
      %v246 = vunpack.c.l.b16 %v186
      %v247 = vunpack.c.l.b16 %v187
      %v248 = vunpack.c.l.b16 %v188
      %v249 = vunpack.c.l.b16 %v189
      %v250 = vunpack.c.l.b16 %v190
      %v251 = vunpack.c.l.b16 %v191
      %v252 = vunpack.c.l.b16 %v192
      %v253 = vunpack.c.l.b16 %v193
      %v254 = vunpack.c.l.b16 %v194
      %v255 = vunpack.c.l.b16 %v195
      %v256 = vunpack.c.l.b16 %v196
      %v257 = vunpack.c.l.b16 %v197
      %v258 = vunpack.c.l.b16 %v198
      %v259 = vunpack.c.l.b16 %v199
      %v260 = vpack.c.b16 %v233, %v232
      %v261 = vpack.c.b16 %v235, %v234
      %v262 = vpack.c.b16 %v237, %v236
      %v263 = vpack.c.b16 %v239, %v238
      %v264 = vpack.c.b16 %v241, %v240
      %v265 = vpack.c.b16 %v243, %v242
      %v266 = vpack.c.b16 %v245, %v244
      %v267 = vpack.c.b16 %v247, %v246
      %v268 = vpack.c.b16 %v249, %v248
      %v269 = vpack.c.b16 %v251, %v250
      %v270 = vpack.c.b16 %v253, %v252
      %v271 = vpack.c.b16 %v255, %v254
      %v272 = vpack.c.b16 %v257, %v256
      %v273 = vpack.c.b16 %v259, %v258
      %v275 = vshrl.u32 %v260, 16
      %v277 = vshll.u32 %v260, 16
      %v279 = vrot.slane %v277, 1
      %v280 = vor.u32 %v275, %v279
      %v282 = vshrl.u32 %v261, 16
      %v284 = vshll.u32 %v261, 16
      %v286 = vrot.slane %v284, 1
      %v287 = vor.u32 %v282, %v286
      %v289 = vshrl.u32 %v262, 16
      %v291 = vshll.u32 %v262, 16
      %v293 = vrot.slane %v291, 1
      %v294 = vor.u32 %v289, %v293
      %v296 = vshrl.u32 %v263, 16
      %v298 = vshll.u32 %v263, 16
      %v300 = vrot.slane %v298, 1
      %v301 = vor.u32 %v296, %v300
      %v303 = vshrl.u32 %v264, 16
      %v305 = vshll.u32 %v264, 16
      %v307 = vrot.slane %v305, 1
      %v308 = vor.u32 %v303, %v307
      %v310 = vshrl.u32 %v265, 16
      %v312 = vshll.u32 %v265, 16
      %v314 = vrot.slane %v312, 1
      %v315 = vor.u32 %v310, %v314
      %v317 = vshrl.u32 %v266, 16
      %v319 = vshll.u32 %v266, 16
      %v321 = vrot.slane %v319, 1
      %v322 = vor.u32 %v317, %v321
      %v324 = vshrl.u32 %v267, 16
      %v326 = vshll.u32 %v267, 16
      %v328 = vrot.slane %v326, 1
      %v329 = vor.u32 %v324, %v328
      %v331 = vshrl.u32 %v268, 16
      %v333 = vshll.u32 %v268, 16
      %v335 = vrot.slane %v333, 1
      %v336 = vor.u32 %v331, %v335
      %v338 = vshrl.u32 %v269, 16
      %v340 = vshll.u32 %v269, 16
      %v342 = vrot.slane %v340, 1
      %v343 = vor.u32 %v338, %v342
      %v345 = vshrl.u32 %v270, 16
      %v347 = vshll.u32 %v270, 16
      %v349 = vrot.slane %v347, 1
      %v350 = vor.u32 %v345, %v349
      %v352 = vshrl.u32 %v271, 16
      %v354 = vshll.u32 %v271, 16
      %v356 = vrot.slane %v354, 1
      %v357 = vor.u32 %v352, %v356
      %v359 = vshrl.u32 %v272, 16
      %v361 = vshll.u32 %v272, 16
      %v363 = vrot.slane %v361, 1
      %v364 = vor.u32 %v359, %v363
      %v366 = vshrl.u32 %v273, 16
      %v368 = vshll.u32 %v273, 16
      %v370 = vrot.slane %v368, 1
      %v371 = vor.u32 %v366, %v370
      %372 = vrot.lane.b32.xlu0 %v280, 4
      %v373 = vpop.permute.xlu0 %372
      %374 = vrot.lane.b32.xlu0 %v287, 4
      %v375 = vpop.permute.xlu0 %374
      %376 = vrot.lane.b32.xlu0 %v294, 4
      %v377 = vpop.permute.xlu0 %376
      %378 = vrot.lane.b32.xlu0 %v301, 4
      %v379 = vpop.permute.xlu0 %378
      %380 = vrot.lane.b32.xlu0 %v308, 4
      %v381 = vpop.permute.xlu0 %380
      %382 = vrot.lane.b32.xlu0 %v315, 4
      %v383 = vpop.permute.xlu0 %382
      %384 = vrot.lane.b32.xlu0 %v322, 4
      %v385 = vpop.permute.xlu0 %384
      %386 = vrot.lane.b32.xlu0 %v329, 4
      %v387 = vpop.permute.xlu0 %386
      %388 = vrot.lane.b32.xlu0 %v336, 4
      %v389 = vpop.permute.xlu0 %388
      %390 = vrot.lane.b32.xlu0 %v343, 4
      %v391 = vpop.permute.xlu0 %390
      %392 = vrot.lane.b32.xlu0 %v350, 4
      %v393 = vpop.permute.xlu0 %392
      %394 = vrot.lane.b32.xlu0 %v357, 4
      %v395 = vpop.permute.xlu0 %394
      %396 = vrot.lane.b32.xlu0 %v364, 4
      %v397 = vpop.permute.xlu0 %396
      %398 = vrot.lane.b32.xlu0 %v371, 4
      %v399 = vpop.permute.xlu0 %398
      %v400 = vrot.slane %v260, 1
      %v401 = vrot.slane %v261, 1
      %v402 = vrot.slane %v262, 1
      %v403 = vrot.slane %v263, 1
      %v404 = vrot.slane %v264, 1
      %v405 = vrot.slane %v265, 1
      %v406 = vrot.slane %v266, 1
      %v407 = vrot.slane %v267, 1
      %v408 = vrot.slane %v268, 1
      %v409 = vrot.slane %v269, 1
      %v410 = vrot.slane %v270, 1
      %v411 = vrot.slane %v271, 1
      %v412 = vrot.slane %v272, 1
      %v413 = vrot.slane %v273, 1
      %414 = vrot.lane.b32.xlu0 %v400, 8
      %v415 = vpop.permute.xlu0 %414
      %416 = vrot.lane.b32.xlu0 %v401, 8
      %v417 = vpop.permute.xlu0 %416
      %418 = vrot.lane.b32.xlu0 %v402, 8
      %v419 = vpop.permute.xlu0 %418
      %420 = vrot.lane.b32.xlu0 %v403, 8
      %v421 = vpop.permute.xlu0 %420
      %422 = vrot.lane.b32.xlu0 %v404, 8
      %v423 = vpop.permute.xlu0 %422
      %424 = vrot.lane.b32.xlu0 %v405, 8
      %v425 = vpop.permute.xlu0 %424
      %426 = vrot.lane.b32.xlu0 %v406, 8
      %v427 = vpop.permute.xlu0 %426
      %428 = vrot.lane.b32.xlu0 %v407, 8
      %v429 = vpop.permute.xlu0 %428
      %430 = vrot.lane.b32.xlu0 %v408, 8
      %v431 = vpop.permute.xlu0 %430
      %432 = vrot.lane.b32.xlu0 %v409, 8
      %v433 = vpop.permute.xlu0 %432
      %434 = vrot.lane.b32.xlu0 %v410, 8
      %v435 = vpop.permute.xlu0 %434
      %436 = vrot.lane.b32.xlu0 %v411, 8
      %v437 = vpop.permute.xlu0 %436
      %438 = vrot.lane.b32.xlu0 %v412, 8
      %v439 = vpop.permute.xlu0 %438
      %440 = vrot.lane.b32.xlu0 %v413, 8
      %v441 = vpop.permute.xlu0 %440
      %v444 = vunpack.c.l.b16 %v200
      %v445 = vunpack.c.l.b16 %v201
      %v446 = vpack.c.b16 %v445, %v444
      %447 = vrot.lane.b32.xlu0 %v261, 12
      %v448 = vpop.permute.xlu0 %447
      %449 = vrot.lane.b32.xlu0 %v262, 12
      %v450 = vpop.permute.xlu0 %449
      %451 = vrot.lane.b32.xlu0 %v263, 12
      %v452 = vpop.permute.xlu0 %451
      %453 = vrot.lane.b32.xlu0 %v264, 12
      %v454 = vpop.permute.xlu0 %453
      %455 = vrot.lane.b32.xlu0 %v265, 12
      %v456 = vpop.permute.xlu0 %455
      %457 = vrot.lane.b32.xlu0 %v266, 12
      %v458 = vpop.permute.xlu0 %457
      %459 = vrot.lane.b32.xlu0 %v267, 12
      %v460 = vpop.permute.xlu0 %459
      %461 = vrot.lane.b32.xlu0 %v268, 12
      %v462 = vpop.permute.xlu0 %461
      %463 = vrot.lane.b32.xlu0 %v269, 12
      %v464 = vpop.permute.xlu0 %463
      %465 = vrot.lane.b32.xlu0 %v270, 12
      %v466 = vpop.permute.xlu0 %465
      %467 = vrot.lane.b32.xlu0 %v271, 12
      %v468 = vpop.permute.xlu0 %467
      %469 = vrot.lane.b32.xlu0 %v272, 12
      %v470 = vpop.permute.xlu0 %469
      %471 = vrot.lane.b32.xlu0 %v273, 12
      %v472 = vpop.permute.xlu0 %471
      %473 = vrot.lane.b32.xlu0 %v446, 12
      %v474 = vpop.permute.xlu0 %473
      %v476 = vshrl.u32 %v446, 16
      %v478 = vshll.u32 %v446, 16
      %v480 = vrot.slane %v478, 1
      %v481 = vor.u32 %v476, %v480
      %482 = vrot.lane.b32.xlu0 %v287, 16
      %v483 = vpop.permute.xlu0 %482
      %484 = vrot.lane.b32.xlu0 %v294, 16
      %v485 = vpop.permute.xlu0 %484
      %486 = vrot.lane.b32.xlu0 %v301, 16
      %v487 = vpop.permute.xlu0 %486
      %488 = vrot.lane.b32.xlu0 %v308, 16
      %v489 = vpop.permute.xlu0 %488
      %490 = vrot.lane.b32.xlu0 %v315, 16
      %v491 = vpop.permute.xlu0 %490
      %492 = vrot.lane.b32.xlu0 %v322, 16
      %v493 = vpop.permute.xlu0 %492
      %494 = vrot.lane.b32.xlu0 %v329, 16
      %v495 = vpop.permute.xlu0 %494
      %496 = vrot.lane.b32.xlu0 %v336, 16
      %v497 = vpop.permute.xlu0 %496
      %498 = vrot.lane.b32.xlu0 %v343, 16
      %v499 = vpop.permute.xlu0 %498
      %500 = vrot.lane.b32.xlu0 %v350, 16
      %v501 = vpop.permute.xlu0 %500
      %502 = vrot.lane.b32.xlu0 %v357, 16
      %v503 = vpop.permute.xlu0 %502
      %504 = vrot.lane.b32.xlu0 %v364, 16
      %v505 = vpop.permute.xlu0 %504
      %506 = vrot.lane.b32.xlu0 %v371, 16
      %v507 = vpop.permute.xlu0 %506
      %508 = vrot.lane.b32.xlu0 %v481, 16
      %v509 = vpop.permute.xlu0 %508
      %v510 = vrot.slane %v446, 1
      %511 = vrot.lane.b32.xlu0 %v401, 20
      %v512 = vpop.permute.xlu0 %511
      %513 = vrot.lane.b32.xlu0 %v402, 20
      %v514 = vpop.permute.xlu0 %513
      %515 = vrot.lane.b32.xlu0 %v403, 20
      %v516 = vpop.permute.xlu0 %515
      %517 = vrot.lane.b32.xlu0 %v404, 20
      %v518 = vpop.permute.xlu0 %517
      %519 = vrot.lane.b32.xlu0 %v405, 20
      %v520 = vpop.permute.xlu0 %519
      %521 = vrot.lane.b32.xlu0 %v406, 20
      %v522 = vpop.permute.xlu0 %521
      %523 = vrot.lane.b32.xlu0 %v407, 20
      %v524 = vpop.permute.xlu0 %523
      %525 = vrot.lane.b32.xlu0 %v408, 20
      %v526 = vpop.permute.xlu0 %525
      %527 = vrot.lane.b32.xlu0 %v409, 20
      %v528 = vpop.permute.xlu0 %527
      %529 = vrot.lane.b32.xlu0 %v410, 20
      %v530 = vpop.permute.xlu0 %529
      %531 = vrot.lane.b32.xlu0 %v411, 20
      %v532 = vpop.permute.xlu0 %531
      %533 = vrot.lane.b32.xlu0 %v412, 20
      %v534 = vpop.permute.xlu0 %533
      %535 = vrot.lane.b32.xlu0 %v413, 20
      %v536 = vpop.permute.xlu0 %535
      %537 = vrot.lane.b32.xlu0 %v510, 20
      %v538 = vpop.permute.xlu0 %537
      %v541 = vunpack.c.l.b16 %v202
      %v542 = vunpack.c.l.b16 %v203
      %v543 = vpack.c.b16 %v542, %v541
      %544 = vrot.lane.b32.xlu0 %v262, 24
      %v545 = vpop.permute.xlu0 %544
      %546 = vrot.lane.b32.xlu0 %v263, 24
      %v547 = vpop.permute.xlu0 %546
      %548 = vrot.lane.b32.xlu0 %v264, 24
      %v549 = vpop.permute.xlu0 %548
      %550 = vrot.lane.b32.xlu0 %v265, 24
      %v551 = vpop.permute.xlu0 %550
      %552 = vrot.lane.b32.xlu0 %v266, 24
      %v553 = vpop.permute.xlu0 %552
      %554 = vrot.lane.b32.xlu0 %v267, 24
      %v555 = vpop.permute.xlu0 %554
      %556 = vrot.lane.b32.xlu0 %v268, 24
      %v557 = vpop.permute.xlu0 %556
      %558 = vrot.lane.b32.xlu0 %v269, 24
      %v559 = vpop.permute.xlu0 %558
      %560 = vrot.lane.b32.xlu0 %v270, 24
      %v561 = vpop.permute.xlu0 %560
      %562 = vrot.lane.b32.xlu0 %v271, 24
      %v563 = vpop.permute.xlu0 %562
      %564 = vrot.lane.b32.xlu0 %v272, 24
      %v565 = vpop.permute.xlu0 %564
      %566 = vrot.lane.b32.xlu0 %v273, 24
      %v567 = vpop.permute.xlu0 %566
      %568 = vrot.lane.b32.xlu0 %v446, 24
      %v569 = vpop.permute.xlu0 %568
      %570 = vrot.lane.b32.xlu0 %v543, 24
      %v571 = vpop.permute.xlu0 %570
      %v573 = vshrl.u32 %v543, 16
      %v575 = vshll.u32 %v543, 16
      %v577 = vrot.slane %v575, 1
      %v578 = vor.u32 %v573, %v577
      %579 = vrot.lane.b32.xlu0 %v294, 28
      %v580 = vpop.permute.xlu0 %579
      %581 = vrot.lane.b32.xlu0 %v301, 28
      %v582 = vpop.permute.xlu0 %581
      %583 = vrot.lane.b32.xlu0 %v308, 28
      %v584 = vpop.permute.xlu0 %583
      %585 = vrot.lane.b32.xlu0 %v315, 28
      %v586 = vpop.permute.xlu0 %585
      %587 = vrot.lane.b32.xlu0 %v322, 28
      %v588 = vpop.permute.xlu0 %587
      %589 = vrot.lane.b32.xlu0 %v329, 28
      %v590 = vpop.permute.xlu0 %589
      %591 = vrot.lane.b32.xlu0 %v336, 28
      %v592 = vpop.permute.xlu0 %591
      %593 = vrot.lane.b32.xlu0 %v343, 28
      %v594 = vpop.permute.xlu0 %593
      %595 = vrot.lane.b32.xlu0 %v350, 28
      %v596 = vpop.permute.xlu0 %595
      %597 = vrot.lane.b32.xlu0 %v357, 28
      %v598 = vpop.permute.xlu0 %597
      %599 = vrot.lane.b32.xlu0 %v364, 28
      %v600 = vpop.permute.xlu0 %599
      %601 = vrot.lane.b32.xlu0 %v371, 28
      %v602 = vpop.permute.xlu0 %601
      %603 = vrot.lane.b32.xlu0 %v481, 28
      %v604 = vpop.permute.xlu0 %603
      %605 = vrot.lane.b32.xlu0 %v578, 28
      %v606 = vpop.permute.xlu0 %605
      %v607 = vrot.slane %v543, 1
      %608 = vrot.lane.b32.xlu0 %v402, 32
      %v609 = vpop.permute.xlu0 %608
      %610 = vrot.lane.b32.xlu0 %v403, 32
      %v611 = vpop.permute.xlu0 %610
      %612 = vrot.lane.b32.xlu0 %v404, 32
      %v613 = vpop.permute.xlu0 %612
      %614 = vrot.lane.b32.xlu0 %v405, 32
      %v615 = vpop.permute.xlu0 %614
      %616 = vrot.lane.b32.xlu0 %v406, 32
      %v617 = vpop.permute.xlu0 %616
      %618 = vrot.lane.b32.xlu0 %v407, 32
      %v619 = vpop.permute.xlu0 %618
      %620 = vrot.lane.b32.xlu0 %v408, 32
      %v621 = vpop.permute.xlu0 %620
      %622 = vrot.lane.b32.xlu0 %v409, 32
      %v623 = vpop.permute.xlu0 %622
      %624 = vrot.lane.b32.xlu0 %v410, 32
      %v625 = vpop.permute.xlu0 %624
      %626 = vrot.lane.b32.xlu0 %v411, 32
      %v627 = vpop.permute.xlu0 %626
      %628 = vrot.lane.b32.xlu0 %v412, 32
      %v629 = vpop.permute.xlu0 %628
      %630 = vrot.lane.b32.xlu0 %v413, 32
      %v631 = vpop.permute.xlu0 %630
      %632 = vrot.lane.b32.xlu0 %v510, 32
      %v633 = vpop.permute.xlu0 %632
      %634 = vrot.lane.b32.xlu0 %v607, 32
      %v635 = vpop.permute.xlu0 %634
      %vm636 = vcmask 31744
      %v638 = vsel %vm636, %v260, %v373
      %v640 = vsel %vm636, %v261, %v375
      %v642 = vsel %vm636, %v262, %v377
      %v644 = vsel %vm636, %v263, %v379
      %v646 = vsel %vm636, %v264, %v381
      %v648 = vsel %vm636, %v265, %v383
      %v650 = vsel %vm636, %v266, %v385
      %v652 = vsel %vm636, %v267, %v387
      %v654 = vsel %vm636, %v268, %v389
      %v656 = vsel %vm636, %v269, %v391
      %v658 = vsel %vm636, %v270, %v393
      %v660 = vsel %vm636, %v271, %v395
      %v662 = vsel %vm636, %v272, %v397
      %v664 = vsel %vm636, %v273, %v399
      %vm665 = vcmask 64512
      %v667 = vsel %vm665, %v638, %v415
      %v669 = vsel %vm665, %v640, %v417
      %v671 = vsel %vm665, %v642, %v419
      %v673 = vsel %vm665, %v644, %v421
      %v675 = vsel %vm665, %v646, %v423
      %v677 = vsel %vm665, %v648, %v425
      %v679 = vsel %vm665, %v650, %v427
      %v681 = vsel %vm665, %v652, %v429
      %v683 = vsel %vm665, %v654, %v431
      %v685 = vsel %vm665, %v656, %v433
      %v687 = vsel %vm665, %v658, %v435
      %v689 = vsel %vm665, %v660, %v437
      %v691 = vsel %vm665, %v662, %v439
      %v693 = vsel %vm665, %v664, %v441
      %vm694 = vcmask 97280
      %v696 = vsel %vm694, %v667, %v448
      %v698 = vsel %vm694, %v669, %v450
      %v700 = vsel %vm694, %v671, %v452
      %v702 = vsel %vm694, %v673, %v454
      %v704 = vsel %vm694, %v675, %v456
      %v706 = vsel %vm694, %v677, %v458
      %v708 = vsel %vm694, %v679, %v460
      %v710 = vsel %vm694, %v681, %v462
      %v712 = vsel %vm694, %v683, %v464
      %v714 = vsel %vm694, %v685, %v466
      %v716 = vsel %vm694, %v687, %v468
      %v718 = vsel %vm694, %v689, %v470
      %v720 = vsel %vm694, %v691, %v472
      %v722 = vsel %vm694, %v693, %v474
      %vm723 = vcmask 130048
      %v725 = vsel %vm723, %v696, %v483
      %v727 = vsel %vm723, %v698, %v485
      %v729 = vsel %vm723, %v700, %v487
      %v731 = vsel %vm723, %v702, %v489
      %v733 = vsel %vm723, %v704, %v491
      %v735 = vsel %vm723, %v706, %v493
      %v737 = vsel %vm723, %v708, %v495
      %v739 = vsel %vm723, %v710, %v497
      %v741 = vsel %vm723, %v712, %v499
      %v743 = vsel %vm723, %v714, %v501
      %v745 = vsel %vm723, %v716, %v503
      %v747 = vsel %vm723, %v718, %v505
      %v749 = vsel %vm723, %v720, %v507
      %v751 = vsel %vm723, %v722, %v509
      %vm752 = vcmask 162816
      %v754 = vsel %vm752, %v725, %v512
      %v756 = vsel %vm752, %v727, %v514
      %v758 = vsel %vm752, %v729, %v516
      %v760 = vsel %vm752, %v731, %v518
      %v762 = vsel %vm752, %v733, %v520
      %v764 = vsel %vm752, %v735, %v522
      %v766 = vsel %vm752, %v737, %v524
      %v768 = vsel %vm752, %v739, %v526
      %v770 = vsel %vm752, %v741, %v528
      %v772 = vsel %vm752, %v743, %v530
      %v774 = vsel %vm752, %v745, %v532
      %v776 = vsel %vm752, %v747, %v534
      %v778 = vsel %vm752, %v749, %v536
      %v780 = vsel %vm752, %v751, %v538
      %vm781 = vcmask 195584
      %v783 = vsel %vm781, %v754, %v545
      %v785 = vsel %vm781, %v756, %v547
      %v787 = vsel %vm781, %v758, %v549
      %v789 = vsel %vm781, %v760, %v551
      %v791 = vsel %vm781, %v762, %v553
      %v793 = vsel %vm781, %v764, %v555
      %v795 = vsel %vm781, %v766, %v557
      %v797 = vsel %vm781, %v768, %v559
      %v799 = vsel %vm781, %v770, %v561
      %v801 = vsel %vm781, %v772, %v563
      %v803 = vsel %vm781, %v774, %v565
      %v805 = vsel %vm781, %v776, %v567
      %v807 = vsel %vm781, %v778, %v569
      %v809 = vsel %vm781, %v780, %v571
      %vm810 = vcmask 228352
      %v812 = vsel %vm810, %v783, %v580
      %v814 = vsel %vm810, %v785, %v582
      %v816 = vsel %vm810, %v787, %v584
      %v818 = vsel %vm810, %v789, %v586
      %v820 = vsel %vm810, %v791, %v588
      %v822 = vsel %vm810, %v793, %v590
      %v824 = vsel %vm810, %v795, %v592
      %v826 = vsel %vm810, %v797, %v594
      %v828 = vsel %vm810, %v799, %v596
      %v830 = vsel %vm810, %v801, %v598
      %v832 = vsel %vm810, %v803, %v600
      %v834 = vsel %vm810, %v805, %v602
      %v836 = vsel %vm810, %v807, %v604
      %v838 = vsel %vm810, %v809, %v606
      %vm839 = vcmask 261120
      %v841 = vsel %vm839, %v812, %v609
      %v843 = vsel %vm839, %v814, %v611
      %v845 = vsel %vm839, %v816, %v613
      %v847 = vsel %vm839, %v818, %v615
      %v849 = vsel %vm839, %v820, %v617
      %v851 = vsel %vm839, %v822, %v619
      %v853 = vsel %vm839, %v824, %v621
      %v855 = vsel %vm839, %v826, %v623
      %v857 = vsel %vm839, %v828, %v625
      %v859 = vsel %vm839, %v830, %v627
      %v861 = vsel %vm839, %v832, %v629
      %v863 = vsel %vm839, %v834, %v631
      %v865 = vsel %vm839, %v836, %v633
      %v867 = vsel %vm839, %v838, %v635
      %v882 = vcombine.high %v841, %v841
      %v884 = vunpack.c.l.s4 1966171168
      %v885 = vunpack.c.0.s8 %v884
      %v886 = vlaneseq
      %v887 = vshrl.u32 %v886, 7
      %v888 = vsub.s32 %v885, %v887
      %v889 = vrot.slane %v841, %v888
      %v891 = vunpack.c.l.s4 1966171168
      %v892 = vunpack.c.0.s8 %v891
      %v893 = vlaneseq
      %v894 = vshrl.u32 %v893, 7
      %v895 = vsub.s32 %v892, %v894
      %v896 = vrot.slane %v882, %v895
      %v897 = vcombine.high %v889, %v889
      %v898 = vcombine.high %v896, %v896
      %v900 = vunpack.c.l.s4 1966171168
      %v901 = vunpack.c.0.s8 %v900
      %v902 = vlaneseq
      %v903 = vshrl.u32 %v902, 7
      %v904 = vsub.s32 %v901, %v903
      %v905 = vrot.slane %v889, %v904
      %v907 = vunpack.c.l.s4 1966171168
      %v908 = vunpack.c.0.s8 %v907
      %v909 = vlaneseq
      %v910 = vshrl.u32 %v909, 7
      %v911 = vsub.s32 %v908, %v910
      %v912 = vrot.slane %v896, %v911
      %v914 = vunpack.c.l.s4 1966171168
      %v915 = vunpack.c.0.s8 %v914
      %v916 = vlaneseq
      %v917 = vshrl.u32 %v916, 7
      %v918 = vsub.s32 %v915, %v917
      %v919 = vrot.slane %v897, %v918
      %v921 = vunpack.c.l.s4 1966171168
      %v922 = vunpack.c.0.s8 %v921
      %v923 = vlaneseq
      %v924 = vshrl.u32 %v923, 7
      %v925 = vsub.s32 %v922, %v924
      %v926 = vrot.slane %v898, %v925
      %v927 = vcombine.high %v905, %v905
      %v928 = vcombine.high %v912, %v912
      %v929 = vcombine.high %v919, %v919
      %v930 = vcombine.high %v843, %v843
      %v932 = vunpack.c.l.s4 1966171168
      %v933 = vunpack.c.0.s8 %v932
      %v934 = vlaneseq
      %v935 = vshrl.u32 %v934, 7
      %v936 = vsub.s32 %v933, %v935
      %v937 = vrot.slane %v843, %v936
      %v939 = vunpack.c.l.s4 1966171168
      %v940 = vunpack.c.0.s8 %v939
      %v941 = vlaneseq
      %v942 = vshrl.u32 %v941, 7
      %v943 = vsub.s32 %v940, %v942
      %v944 = vrot.slane %v930, %v943
      %v945 = vcombine.high %v937, %v937
      %v946 = vcombine.high %v944, %v944
      %v948 = vunpack.c.l.s4 1966171168
      %v949 = vunpack.c.0.s8 %v948
      %v950 = vlaneseq
      %v951 = vshrl.u32 %v950, 7
      %v952 = vsub.s32 %v949, %v951
      %v953 = vrot.slane %v937, %v952
      %v955 = vunpack.c.l.s4 1966171168
      %v956 = vunpack.c.0.s8 %v955
      %v957 = vlaneseq
      %v958 = vshrl.u32 %v957, 7
      %v959 = vsub.s32 %v956, %v958
      %v960 = vrot.slane %v944, %v959
      %v962 = vunpack.c.l.s4 1966171168
      %v963 = vunpack.c.0.s8 %v962
      %v964 = vlaneseq
      %v965 = vshrl.u32 %v964, 7
      %v966 = vsub.s32 %v963, %v965
      %v967 = vrot.slane %v945, %v966
      %v969 = vunpack.c.l.s4 1966171168
      %v970 = vunpack.c.0.s8 %v969
      %v971 = vlaneseq
      %v972 = vshrl.u32 %v971, 7
      %v973 = vsub.s32 %v970, %v972
      %v974 = vrot.slane %v946, %v973
      %v975 = vcombine.high %v953, %v953
      %v976 = vcombine.high %v960, %v960
      %v977 = vcombine.high %v967, %v967
      %v978 = vcombine.high %v845, %v845
      %v980 = vunpack.c.l.s4 1966171168
      %v981 = vunpack.c.0.s8 %v980
      %v982 = vlaneseq
      %v983 = vshrl.u32 %v982, 7
      %v984 = vsub.s32 %v981, %v983
      %v985 = vrot.slane %v845, %v984
      %v987 = vunpack.c.l.s4 1966171168
      %v988 = vunpack.c.0.s8 %v987
      %v989 = vlaneseq
      %v990 = vshrl.u32 %v989, 7
      %v991 = vsub.s32 %v988, %v990
      %v992 = vrot.slane %v978, %v991
      %v993 = vcombine.high %v985, %v985
      %v994 = vcombine.high %v992, %v992
      %v996 = vunpack.c.l.s4 1966171168
      %v997 = vunpack.c.0.s8 %v996
      %v998 = vlaneseq
      %v999 = vshrl.u32 %v998, 7
      %v1000 = vsub.s32 %v997, %v999
      %v1001 = vrot.slane %v985, %v1000
      %v1003 = vunpack.c.l.s4 1966171168
      %v1004 = vunpack.c.0.s8 %v1003
      %v1005 = vlaneseq
      %v1006 = vshrl.u32 %v1005, 7
      %v1007 = vsub.s32 %v1004, %v1006
      %v1008 = vrot.slane %v992, %v1007
      %v1010 = vunpack.c.l.s4 1966171168
      %v1011 = vunpack.c.0.s8 %v1010
      %v1012 = vlaneseq
      %v1013 = vshrl.u32 %v1012, 7
      %v1014 = vsub.s32 %v1011, %v1013
      %v1015 = vrot.slane %v993, %v1014
      %v1017 = vunpack.c.l.s4 1966171168
      %v1018 = vunpack.c.0.s8 %v1017
      %v1019 = vlaneseq
      %v1020 = vshrl.u32 %v1019, 7
      %v1021 = vsub.s32 %v1018, %v1020
      %v1022 = vrot.slane %v994, %v1021
      %v1023 = vcombine.high %v1001, %v1001
      %v1024 = vcombine.high %v1008, %v1008
      %v1025 = vcombine.high %v1015, %v1015
      %v1026 = vcombine.high %v847, %v847
      %v1028 = vunpack.c.l.s4 1966171168
      %v1029 = vunpack.c.0.s8 %v1028
      %v1030 = vlaneseq
      %v1031 = vshrl.u32 %v1030, 7
      %v1032 = vsub.s32 %v1029, %v1031
      %v1033 = vrot.slane %v847, %v1032
      %v1035 = vunpack.c.l.s4 1966171168
      %v1036 = vunpack.c.0.s8 %v1035
      %v1037 = vlaneseq
      %v1038 = vshrl.u32 %v1037, 7
      %v1039 = vsub.s32 %v1036, %v1038
      %v1040 = vrot.slane %v1026, %v1039
      %v1041 = vcombine.high %v1033, %v1033
      %v1042 = vcombine.high %v1040, %v1040
      %v1044 = vunpack.c.l.s4 1966171168
      %v1045 = vunpack.c.0.s8 %v1044
      %v1046 = vlaneseq
      %v1047 = vshrl.u32 %v1046, 7
      %v1048 = vsub.s32 %v1045, %v1047
      %v1049 = vrot.slane %v1033, %v1048
      %v1051 = vunpack.c.l.s4 1966171168
      %v1052 = vunpack.c.0.s8 %v1051
      %v1053 = vlaneseq
      %v1054 = vshrl.u32 %v1053, 7
      %v1055 = vsub.s32 %v1052, %v1054
      %v1056 = vrot.slane %v1040, %v1055
      %v1058 = vunpack.c.l.s4 1966171168
      %v1059 = vunpack.c.0.s8 %v1058
      %v1060 = vlaneseq
      %v1061 = vshrl.u32 %v1060, 7
      %v1062 = vsub.s32 %v1059, %v1061
      %v1063 = vrot.slane %v1041, %v1062
      %v1065 = vunpack.c.l.s4 1966171168
      %v1066 = vunpack.c.0.s8 %v1065
      %v1067 = vlaneseq
      %v1068 = vshrl.u32 %v1067, 7
      %v1069 = vsub.s32 %v1066, %v1068
      %v1070 = vrot.slane %v1042, %v1069
      %v1071 = vcombine.high %v1049, %v1049
      %v1072 = vcombine.high %v1056, %v1056
      %v1073 = vcombine.high %v1063, %v1063
      %v1074 = vcombine.high %v849, %v849
      %v1076 = vunpack.c.l.s4 1966171168
      %v1077 = vunpack.c.0.s8 %v1076
      %v1078 = vlaneseq
      %v1079 = vshrl.u32 %v1078, 7
      %v1080 = vsub.s32 %v1077, %v1079
      %v1081 = vrot.slane %v849, %v1080
      %v1083 = vunpack.c.l.s4 1966171168
      %v1084 = vunpack.c.0.s8 %v1083
      %v1085 = vlaneseq
      %v1086 = vshrl.u32 %v1085, 7
      %v1087 = vsub.s32 %v1084, %v1086
      %v1088 = vrot.slane %v1074, %v1087
      %v1089 = vcombine.high %v1081, %v1081
      %v1090 = vcombine.high %v1088, %v1088
      %v1092 = vunpack.c.l.s4 1966171168
      %v1093 = vunpack.c.0.s8 %v1092
      %v1094 = vlaneseq
      %v1095 = vshrl.u32 %v1094, 7
      %v1096 = vsub.s32 %v1093, %v1095
      %v1097 = vrot.slane %v1081, %v1096
      %v1099 = vunpack.c.l.s4 1966171168
      %v1100 = vunpack.c.0.s8 %v1099
      %v1101 = vlaneseq
      %v1102 = vshrl.u32 %v1101, 7
      %v1103 = vsub.s32 %v1100, %v1102
      %v1104 = vrot.slane %v1088, %v1103
      %v1106 = vunpack.c.l.s4 1966171168
      %v1107 = vunpack.c.0.s8 %v1106
      %v1108 = vlaneseq
      %v1109 = vshrl.u32 %v1108, 7
      %v1110 = vsub.s32 %v1107, %v1109
      %v1111 = vrot.slane %v1089, %v1110
      %v1113 = vunpack.c.l.s4 1966171168
      %v1114 = vunpack.c.0.s8 %v1113
      %v1115 = vlaneseq
      %v1116 = vshrl.u32 %v1115, 7
      %v1117 = vsub.s32 %v1114, %v1116
      %v1118 = vrot.slane %v1090, %v1117
      %v1119 = vcombine.high %v1097, %v1097
      %v1120 = vcombine.high %v1104, %v1104
      %v1121 = vcombine.high %v1111, %v1111
      %v1122 = vcombine.high %v851, %v851
      %v1124 = vunpack.c.l.s4 1966171168
      %v1125 = vunpack.c.0.s8 %v1124
      %v1126 = vlaneseq
      %v1127 = vshrl.u32 %v1126, 7
      %v1128 = vsub.s32 %v1125, %v1127
      %v1129 = vrot.slane %v851, %v1128
      %v1131 = vunpack.c.l.s4 1966171168
      %v1132 = vunpack.c.0.s8 %v1131
      %v1133 = vlaneseq
      %v1134 = vshrl.u32 %v1133, 7
      %v1135 = vsub.s32 %v1132, %v1134
      %v1136 = vrot.slane %v1122, %v1135
      %v1137 = vcombine.high %v1129, %v1129
      %v1138 = vcombine.high %v1136, %v1136
      %v1140 = vunpack.c.l.s4 1966171168
      %v1141 = vunpack.c.0.s8 %v1140
      %v1142 = vlaneseq
      %v1143 = vshrl.u32 %v1142, 7
      %v1144 = vsub.s32 %v1141, %v1143
      %v1145 = vrot.slane %v1129, %v1144
      %v1147 = vunpack.c.l.s4 1966171168
      %v1148 = vunpack.c.0.s8 %v1147
      %v1149 = vlaneseq
      %v1150 = vshrl.u32 %v1149, 7
      %v1151 = vsub.s32 %v1148, %v1150
      %v1152 = vrot.slane %v1136, %v1151
      %v1154 = vunpack.c.l.s4 1966171168
      %v1155 = vunpack.c.0.s8 %v1154
      %v1156 = vlaneseq
      %v1157 = vshrl.u32 %v1156, 7
      %v1158 = vsub.s32 %v1155, %v1157
      %v1159 = vrot.slane %v1137, %v1158
      %v1161 = vunpack.c.l.s4 1966171168
      %v1162 = vunpack.c.0.s8 %v1161
      %v1163 = vlaneseq
      %v1164 = vshrl.u32 %v1163, 7
      %v1165 = vsub.s32 %v1162, %v1164
      %v1166 = vrot.slane %v1138, %v1165
      %v1167 = vcombine.high %v1145, %v1145
      %v1168 = vcombine.high %v1152, %v1152
      %v1169 = vcombine.high %v1159, %v1159
      %v1170 = vcombine.high %v853, %v853
      %v1172 = vunpack.c.l.s4 1966171168
      %v1173 = vunpack.c.0.s8 %v1172
      %v1174 = vlaneseq
      %v1175 = vshrl.u32 %v1174, 7
      %v1176 = vsub.s32 %v1173, %v1175
      %v1177 = vrot.slane %v853, %v1176
      %v1179 = vunpack.c.l.s4 1966171168
      %v1180 = vunpack.c.0.s8 %v1179
      %v1181 = vlaneseq
      %v1182 = vshrl.u32 %v1181, 7
      %v1183 = vsub.s32 %v1180, %v1182
      %v1184 = vrot.slane %v1170, %v1183
      %v1185 = vcombine.high %v1177, %v1177
      %v1186 = vcombine.high %v1184, %v1184
      %v1188 = vunpack.c.l.s4 1966171168
      %v1189 = vunpack.c.0.s8 %v1188
      %v1190 = vlaneseq
      %v1191 = vshrl.u32 %v1190, 7
      %v1192 = vsub.s32 %v1189, %v1191
      %v1193 = vrot.slane %v1177, %v1192
      %v1195 = vunpack.c.l.s4 1966171168
      %v1196 = vunpack.c.0.s8 %v1195
      %v1197 = vlaneseq
      %v1198 = vshrl.u32 %v1197, 7
      %v1199 = vsub.s32 %v1196, %v1198
      %v1200 = vrot.slane %v1184, %v1199
      %v1202 = vunpack.c.l.s4 1966171168
      %v1203 = vunpack.c.0.s8 %v1202
      %v1204 = vlaneseq
      %v1205 = vshrl.u32 %v1204, 7
      %v1206 = vsub.s32 %v1203, %v1205
      %v1207 = vrot.slane %v1185, %v1206
      %v1209 = vunpack.c.l.s4 1966171168
      %v1210 = vunpack.c.0.s8 %v1209
      %v1211 = vlaneseq
      %v1212 = vshrl.u32 %v1211, 7
      %v1213 = vsub.s32 %v1210, %v1212
      %v1214 = vrot.slane %v1186, %v1213
      %v1215 = vcombine.high %v1193, %v1193
      %v1216 = vcombine.high %v1200, %v1200
      %v1217 = vcombine.high %v1207, %v1207
      %v1218 = vcombine.high %v855, %v855
      %v1220 = vunpack.c.l.s4 1966171168
      %v1221 = vunpack.c.0.s8 %v1220
      %v1222 = vlaneseq
      %v1223 = vshrl.u32 %v1222, 7
      %v1224 = vsub.s32 %v1221, %v1223
      %v1225 = vrot.slane %v855, %v1224
      %v1227 = vunpack.c.l.s4 1966171168
      %v1228 = vunpack.c.0.s8 %v1227
      %v1229 = vlaneseq
      %v1230 = vshrl.u32 %v1229, 7
      %v1231 = vsub.s32 %v1228, %v1230
      %v1232 = vrot.slane %v1218, %v1231
      %v1233 = vcombine.high %v1225, %v1225
      %v1234 = vcombine.high %v1232, %v1232
      %v1236 = vunpack.c.l.s4 1966171168
      %v1237 = vunpack.c.0.s8 %v1236
      %v1238 = vlaneseq
      %v1239 = vshrl.u32 %v1238, 7
      %v1240 = vsub.s32 %v1237, %v1239
      %v1241 = vrot.slane %v1225, %v1240
      %v1243 = vunpack.c.l.s4 1966171168
      %v1244 = vunpack.c.0.s8 %v1243
      %v1245 = vlaneseq
      %v1246 = vshrl.u32 %v1245, 7
      %v1247 = vsub.s32 %v1244, %v1246
      %v1248 = vrot.slane %v1232, %v1247
      %v1250 = vunpack.c.l.s4 1966171168
      %v1251 = vunpack.c.0.s8 %v1250
      %v1252 = vlaneseq
      %v1253 = vshrl.u32 %v1252, 7
      %v1254 = vsub.s32 %v1251, %v1253
      %v1255 = vrot.slane %v1233, %v1254
      %v1257 = vunpack.c.l.s4 1966171168
      %v1258 = vunpack.c.0.s8 %v1257
      %v1259 = vlaneseq
      %v1260 = vshrl.u32 %v1259, 7
      %v1261 = vsub.s32 %v1258, %v1260
      %v1262 = vrot.slane %v1234, %v1261
      %v1263 = vcombine.high %v1241, %v1241
      %v1264 = vcombine.high %v1248, %v1248
      %v1265 = vcombine.high %v1255, %v1255
      %v1266 = vcombine.high %v857, %v857
      %v1268 = vunpack.c.l.s4 1966171168
      %v1269 = vunpack.c.0.s8 %v1268
      %v1270 = vlaneseq
      %v1271 = vshrl.u32 %v1270, 7
      %v1272 = vsub.s32 %v1269, %v1271
      %v1273 = vrot.slane %v857, %v1272
      %v1275 = vunpack.c.l.s4 1966171168
      %v1276 = vunpack.c.0.s8 %v1275
      %v1277 = vlaneseq
      %v1278 = vshrl.u32 %v1277, 7
      %v1279 = vsub.s32 %v1276, %v1278
      %v1280 = vrot.slane %v1266, %v1279
      %v1281 = vcombine.high %v1273, %v1273
      %v1282 = vcombine.high %v1280, %v1280
      %v1284 = vunpack.c.l.s4 1966171168
      %v1285 = vunpack.c.0.s8 %v1284
      %v1286 = vlaneseq
      %v1287 = vshrl.u32 %v1286, 7
      %v1288 = vsub.s32 %v1285, %v1287
      %v1289 = vrot.slane %v1273, %v1288
      %v1291 = vunpack.c.l.s4 1966171168
      %v1292 = vunpack.c.0.s8 %v1291
      %v1293 = vlaneseq
      %v1294 = vshrl.u32 %v1293, 7
      %v1295 = vsub.s32 %v1292, %v1294
      %v1296 = vrot.slane %v1280, %v1295
      %v1298 = vunpack.c.l.s4 1966171168
      %v1299 = vunpack.c.0.s8 %v1298
      %v1300 = vlaneseq
      %v1301 = vshrl.u32 %v1300, 7
      %v1302 = vsub.s32 %v1299, %v1301
      %v1303 = vrot.slane %v1281, %v1302
      %v1305 = vunpack.c.l.s4 1966171168
      %v1306 = vunpack.c.0.s8 %v1305
      %v1307 = vlaneseq
      %v1308 = vshrl.u32 %v1307, 7
      %v1309 = vsub.s32 %v1306, %v1308
      %v1310 = vrot.slane %v1282, %v1309
      %v1311 = vcombine.high %v1289, %v1289
      %v1312 = vcombine.high %v1296, %v1296
      %v1313 = vcombine.high %v1303, %v1303
      %v1314 = vcombine.high %v859, %v859
      %v1316 = vunpack.c.l.s4 1966171168
      %v1317 = vunpack.c.0.s8 %v1316
      %v1318 = vlaneseq
      %v1319 = vshrl.u32 %v1318, 7
      %v1320 = vsub.s32 %v1317, %v1319
      %v1321 = vrot.slane %v859, %v1320
      %v1323 = vunpack.c.l.s4 1966171168
      %v1324 = vunpack.c.0.s8 %v1323
      %v1325 = vlaneseq
      %v1326 = vshrl.u32 %v1325, 7
      %v1327 = vsub.s32 %v1324, %v1326
      %v1328 = vrot.slane %v1314, %v1327
      %v1329 = vcombine.high %v1321, %v1321
      %v1330 = vcombine.high %v1328, %v1328
      %v1332 = vunpack.c.l.s4 1966171168
      %v1333 = vunpack.c.0.s8 %v1332
      %v1334 = vlaneseq
      %v1335 = vshrl.u32 %v1334, 7
      %v1336 = vsub.s32 %v1333, %v1335
      %v1337 = vrot.slane %v1321, %v1336
      %v1339 = vunpack.c.l.s4 1966171168
      %v1340 = vunpack.c.0.s8 %v1339
      %v1341 = vlaneseq
      %v1342 = vshrl.u32 %v1341, 7
      %v1343 = vsub.s32 %v1340, %v1342
      %v1344 = vrot.slane %v1328, %v1343
      %v1346 = vunpack.c.l.s4 1966171168
      %v1347 = vunpack.c.0.s8 %v1346
      %v1348 = vlaneseq
      %v1349 = vshrl.u32 %v1348, 7
      %v1350 = vsub.s32 %v1347, %v1349
      %v1351 = vrot.slane %v1329, %v1350
      %v1353 = vunpack.c.l.s4 1966171168
      %v1354 = vunpack.c.0.s8 %v1353
      %v1355 = vlaneseq
      %v1356 = vshrl.u32 %v1355, 7
      %v1357 = vsub.s32 %v1354, %v1356
      %v1358 = vrot.slane %v1330, %v1357
      %v1359 = vcombine.high %v1337, %v1337
      %v1360 = vcombine.high %v1344, %v1344
      %v1361 = vcombine.high %v1351, %v1351
      %v1362 = vcombine.high %v861, %v861
      %v1364 = vunpack.c.l.s4 1966171168
      %v1365 = vunpack.c.0.s8 %v1364
      %v1366 = vlaneseq
      %v1367 = vshrl.u32 %v1366, 7
      %v1368 = vsub.s32 %v1365, %v1367
      %v1369 = vrot.slane %v861, %v1368
      %v1371 = vunpack.c.l.s4 1966171168
      %v1372 = vunpack.c.0.s8 %v1371
      %v1373 = vlaneseq
      %v1374 = vshrl.u32 %v1373, 7
      %v1375 = vsub.s32 %v1372, %v1374
      %v1376 = vrot.slane %v1362, %v1375
      %v1377 = vcombine.high %v1369, %v1369
      %v1378 = vcombine.high %v1376, %v1376
      %v1380 = vunpack.c.l.s4 1966171168
      %v1381 = vunpack.c.0.s8 %v1380
      %v1382 = vlaneseq
      %v1383 = vshrl.u32 %v1382, 7
      %v1384 = vsub.s32 %v1381, %v1383
      %v1385 = vrot.slane %v1369, %v1384
      %v1387 = vunpack.c.l.s4 1966171168
      %v1388 = vunpack.c.0.s8 %v1387
      %v1389 = vlaneseq
      %v1390 = vshrl.u32 %v1389, 7
      %v1391 = vsub.s32 %v1388, %v1390
      %v1392 = vrot.slane %v1376, %v1391
      %v1394 = vunpack.c.l.s4 1966171168
      %v1395 = vunpack.c.0.s8 %v1394
      %v1396 = vlaneseq
      %v1397 = vshrl.u32 %v1396, 7
      %v1398 = vsub.s32 %v1395, %v1397
      %v1399 = vrot.slane %v1377, %v1398
      %v1401 = vunpack.c.l.s4 1966171168
      %v1402 = vunpack.c.0.s8 %v1401
      %v1403 = vlaneseq
      %v1404 = vshrl.u32 %v1403, 7
      %v1405 = vsub.s32 %v1402, %v1404
      %v1406 = vrot.slane %v1378, %v1405
      %v1407 = vcombine.high %v1385, %v1385
      %v1408 = vcombine.high %v1392, %v1392
      %v1409 = vcombine.high %v1399, %v1399
      %v1410 = vcombine.high %v863, %v863
      %v1412 = vunpack.c.l.s4 1966171168
      %v1413 = vunpack.c.0.s8 %v1412
      %v1414 = vlaneseq
      %v1415 = vshrl.u32 %v1414, 7
      %v1416 = vsub.s32 %v1413, %v1415
      %v1417 = vrot.slane %v863, %v1416
      %v1419 = vunpack.c.l.s4 1966171168
      %v1420 = vunpack.c.0.s8 %v1419
      %v1421 = vlaneseq
      %v1422 = vshrl.u32 %v1421, 7
      %v1423 = vsub.s32 %v1420, %v1422
      %v1424 = vrot.slane %v1410, %v1423
      %v1425 = vcombine.high %v1417, %v1417
      %v1426 = vcombine.high %v1424, %v1424
      %v1428 = vunpack.c.l.s4 1966171168
      %v1429 = vunpack.c.0.s8 %v1428
      %v1430 = vlaneseq
      %v1431 = vshrl.u32 %v1430, 7
      %v1432 = vsub.s32 %v1429, %v1431
      %v1433 = vrot.slane %v1417, %v1432
      %v1435 = vunpack.c.l.s4 1966171168
      %v1436 = vunpack.c.0.s8 %v1435
      %v1437 = vlaneseq
      %v1438 = vshrl.u32 %v1437, 7
      %v1439 = vsub.s32 %v1436, %v1438
      %v1440 = vrot.slane %v1424, %v1439
      %v1442 = vunpack.c.l.s4 1966171168
      %v1443 = vunpack.c.0.s8 %v1442
      %v1444 = vlaneseq
      %v1445 = vshrl.u32 %v1444, 7
      %v1446 = vsub.s32 %v1443, %v1445
      %v1447 = vrot.slane %v1425, %v1446
      %v1449 = vunpack.c.l.s4 1966171168
      %v1450 = vunpack.c.0.s8 %v1449
      %v1451 = vlaneseq
      %v1452 = vshrl.u32 %v1451, 7
      %v1453 = vsub.s32 %v1450, %v1452
      %v1454 = vrot.slane %v1426, %v1453
      %v1455 = vcombine.high %v1433, %v1433
      %v1456 = vcombine.high %v1440, %v1440
      %v1457 = vcombine.high %v1447, %v1447
      %v1458 = vcombine.high %v865, %v865
      %v1460 = vunpack.c.l.s4 1966171168
      %v1461 = vunpack.c.0.s8 %v1460
      %v1462 = vlaneseq
      %v1463 = vshrl.u32 %v1462, 7
      %v1464 = vsub.s32 %v1461, %v1463
      %v1465 = vrot.slane %v865, %v1464
      %v1467 = vunpack.c.l.s4 1966171168
      %v1468 = vunpack.c.0.s8 %v1467
      %v1469 = vlaneseq
      %v1470 = vshrl.u32 %v1469, 7
      %v1471 = vsub.s32 %v1468, %v1470
      %v1472 = vrot.slane %v1458, %v1471
      %v1473 = vcombine.high %v1465, %v1465
      %v1474 = vcombine.high %v1472, %v1472
      %v1476 = vunpack.c.l.s4 1966171168
      %v1477 = vunpack.c.0.s8 %v1476
      %v1478 = vlaneseq
      %v1479 = vshrl.u32 %v1478, 7
      %v1480 = vsub.s32 %v1477, %v1479
      %v1481 = vrot.slane %v1465, %v1480
      %v1483 = vunpack.c.l.s4 1966171168
      %v1484 = vunpack.c.0.s8 %v1483
      %v1485 = vlaneseq
      %v1486 = vshrl.u32 %v1485, 7
      %v1487 = vsub.s32 %v1484, %v1486
      %v1488 = vrot.slane %v1472, %v1487
      %v1490 = vunpack.c.l.s4 1966171168
      %v1491 = vunpack.c.0.s8 %v1490
      %v1492 = vlaneseq
      %v1493 = vshrl.u32 %v1492, 7
      %v1494 = vsub.s32 %v1491, %v1493
      %v1495 = vrot.slane %v1473, %v1494
      %v1497 = vunpack.c.l.s4 1966171168
      %v1498 = vunpack.c.0.s8 %v1497
      %v1499 = vlaneseq
      %v1500 = vshrl.u32 %v1499, 7
      %v1501 = vsub.s32 %v1498, %v1500
      %v1502 = vrot.slane %v1474, %v1501
      %v1503 = vcombine.high %v1481, %v1481
      %v1504 = vcombine.high %v1488, %v1488
      %v1505 = vcombine.high %v1495, %v1495
      %v1506 = vcombine.high %v867, %v867
      %v1508 = vunpack.c.l.s4 1966171168
      %v1509 = vunpack.c.0.s8 %v1508
      %v1510 = vlaneseq
      %v1511 = vshrl.u32 %v1510, 7
      %v1512 = vsub.s32 %v1509, %v1511
      %v1513 = vrot.slane %v867, %v1512
      %v1515 = vunpack.c.l.s4 1966171168
      %v1516 = vunpack.c.0.s8 %v1515
      %v1517 = vlaneseq
      %v1518 = vshrl.u32 %v1517, 7
      %v1519 = vsub.s32 %v1516, %v1518
      %v1520 = vrot.slane %v1506, %v1519
      %v1521 = vcombine.high %v1513, %v1513
      %v1522 = vcombine.high %v1520, %v1520
      %v1524 = vunpack.c.l.s4 1966171168
      %v1525 = vunpack.c.0.s8 %v1524
      %v1526 = vlaneseq
      %v1527 = vshrl.u32 %v1526, 7
      %v1528 = vsub.s32 %v1525, %v1527
      %v1529 = vrot.slane %v1513, %v1528
      %v1531 = vunpack.c.l.s4 1966171168
      %v1532 = vunpack.c.0.s8 %v1531
      %v1533 = vlaneseq
      %v1534 = vshrl.u32 %v1533, 7
      %v1535 = vsub.s32 %v1532, %v1534
      %v1536 = vrot.slane %v1520, %v1535
      %v1538 = vunpack.c.l.s4 1966171168
      %v1539 = vunpack.c.0.s8 %v1538
      %v1540 = vlaneseq
      %v1541 = vshrl.u32 %v1540, 7
      %v1542 = vsub.s32 %v1539, %v1541
      %v1543 = vrot.slane %v1521, %v1542
      %v1545 = vunpack.c.l.s4 1966171168
      %v1546 = vunpack.c.0.s8 %v1545
      %v1547 = vlaneseq
      %v1548 = vshrl.u32 %v1547, 7
      %v1549 = vsub.s32 %v1546, %v1548
      %v1550 = vrot.slane %v1522, %v1549
      %v1551 = vcombine.high %v1529, %v1529
      %v1552 = vcombine.high %v1536, %v1536
      %v1553 = vcombine.high %v1543, %v1543
      %v1554 = vld [vmem:[%s1] sm:$0xf]
      %v1555 = vld [vmem:[%s1 + $0x4] sm:$0xf]
      %v1556 = vld [vmem:[%s1 + $0x8] sm:$0xf]
      %v1557 = vld [vmem:[%s1 + $0xc] sm:$0xf]
      %v1558 = vld [vmem:[%s1 + $0x10] sm:$0x3]
      %v1559 = vld [vmem:[%s2] sm:$0x1]
      %v1561 = vlaneseq
      %v1562 = vshrl.u32 %v1561, 7
      %v1563 = vsub.s32 0, %v1562
      %v1564 = vrot.slane %v1559, %v1563
      %v1566 = vcombine.low %v905, %v919
      %v1567 = vcombine.low %v927, %v929
      %v1568 = vcombine.low %v912, %v926
      %v1569 = vcombine.low %v928, %v953
      %v1571 = vunpack.c.l.s4 1966171168
      %v1572 = vunpack.c.0.s8 %v1571
      %v1573 = vlaneseq
      %v1574 = vshrl.u32 %v1573, 7
      %v1575 = vsub.s32 %v1572, %v1574
      %v1576 = vrot.slane %v1566, %v1575
      %v1578 = vunpack.c.l.s4 1966171168
      %v1579 = vunpack.c.0.s8 %v1578
      %v1580 = vlaneseq
      %v1581 = vshrl.u32 %v1580, 7
      %v1582 = vsub.s32 %v1579, %v1581
      %v1583 = vrot.slane %v1567, %v1582
      %v1585 = vunpack.c.l.s4 1966171168
      %v1586 = vunpack.c.0.s8 %v1585
      %v1587 = vlaneseq
      %v1588 = vshrl.u32 %v1587, 7
      %v1589 = vsub.s32 %v1586, %v1588
      %v1590 = vrot.slane %v1568, %v1589
      %v1592 = vunpack.c.l.s4 1966171168
      %v1593 = vunpack.c.0.s8 %v1592
      %v1594 = vlaneseq
      %v1595 = vshrl.u32 %v1594, 7
      %v1596 = vsub.s32 %v1593, %v1595
      %v1597 = vrot.slane %v1569, %v1596
      %v1598 = vcombine.low %v1576, %v1583
      %v1599 = vcombine.low %v1590, %v1597
      %v1601 = vunpack.c.l.s4 1966171168
      %v1602 = vunpack.c.0.s8 %v1601
      %v1603 = vlaneseq
      %v1604 = vshrl.u32 %v1603, 7
      %v1605 = vsub.s32 %v1602, %v1604
      %v1606 = vrot.slane %v1598, %v1605
      %v1608 = vunpack.c.l.s4 1966171168
      %v1609 = vunpack.c.0.s8 %v1608
      %v1610 = vlaneseq
      %v1611 = vshrl.u32 %v1610, 7
      %v1612 = vsub.s32 %v1609, %v1611
      %v1613 = vrot.slane %v1599, %v1612
      %v1614 = vcombine.low %v1606, %v1613
      %v1615 = vcombine.low %v967, %v975
      %v1616 = vcombine.low %v977, %v960
      %v1617 = vcombine.low %v974, %v976
      %v1618 = vcombine.low %v1001, %v1015
      %v1620 = vunpack.c.l.s4 1966171168
      %v1621 = vunpack.c.0.s8 %v1620
      %v1622 = vlaneseq
      %v1623 = vshrl.u32 %v1622, 7
      %v1624 = vsub.s32 %v1621, %v1623
      %v1625 = vrot.slane %v1615, %v1624
      %v1627 = vunpack.c.l.s4 1966171168
      %v1628 = vunpack.c.0.s8 %v1627
      %v1629 = vlaneseq
      %v1630 = vshrl.u32 %v1629, 7
      %v1631 = vsub.s32 %v1628, %v1630
      %v1632 = vrot.slane %v1616, %v1631
      %v1634 = vunpack.c.l.s4 1966171168
      %v1635 = vunpack.c.0.s8 %v1634
      %v1636 = vlaneseq
      %v1637 = vshrl.u32 %v1636, 7
      %v1638 = vsub.s32 %v1635, %v1637
      %v1639 = vrot.slane %v1617, %v1638
      %v1641 = vunpack.c.l.s4 1966171168
      %v1642 = vunpack.c.0.s8 %v1641
      %v1643 = vlaneseq
      %v1644 = vshrl.u32 %v1643, 7
      %v1645 = vsub.s32 %v1642, %v1644
      %v1646 = vrot.slane %v1618, %v1645
      %v1647 = vcombine.low %v1625, %v1632
      %v1648 = vcombine.low %v1639, %v1646
      %v1650 = vunpack.c.l.s4 1966171168
      %v1651 = vunpack.c.0.s8 %v1650
      %v1652 = vlaneseq
      %v1653 = vshrl.u32 %v1652, 7
      %v1654 = vsub.s32 %v1651, %v1653
      %v1655 = vrot.slane %v1647, %v1654
      %v1657 = vunpack.c.l.s4 1966171168
      %v1658 = vunpack.c.0.s8 %v1657
      %v1659 = vlaneseq
      %v1660 = vshrl.u32 %v1659, 7
      %v1661 = vsub.s32 %v1658, %v1660
      %v1662 = vrot.slane %v1648, %v1661
      %v1663 = vcombine.low %v1655, %v1662
      %v1664 = vcombine.low %v1023, %v1025
      %v1665 = vcombine.low %v1008, %v1022
      %v1666 = vcombine.low %v1024, %v1049
      %v1667 = vcombine.low %v1063, %v1071
      %v1669 = vunpack.c.l.s4 1966171168
      %v1670 = vunpack.c.0.s8 %v1669
      %v1671 = vlaneseq
      %v1672 = vshrl.u32 %v1671, 7
      %v1673 = vsub.s32 %v1670, %v1672
      %v1674 = vrot.slane %v1664, %v1673
      %v1676 = vunpack.c.l.s4 1966171168
      %v1677 = vunpack.c.0.s8 %v1676
      %v1678 = vlaneseq
      %v1679 = vshrl.u32 %v1678, 7
      %v1680 = vsub.s32 %v1677, %v1679
      %v1681 = vrot.slane %v1665, %v1680
      %v1683 = vunpack.c.l.s4 1966171168
      %v1684 = vunpack.c.0.s8 %v1683
      %v1685 = vlaneseq
      %v1686 = vshrl.u32 %v1685, 7
      %v1687 = vsub.s32 %v1684, %v1686
      %v1688 = vrot.slane %v1666, %v1687
      %v1690 = vunpack.c.l.s4 1966171168
      %v1691 = vunpack.c.0.s8 %v1690
      %v1692 = vlaneseq
      %v1693 = vshrl.u32 %v1692, 7
      %v1694 = vsub.s32 %v1691, %v1693
      %v1695 = vrot.slane %v1667, %v1694
      %v1696 = vcombine.low %v1674, %v1681
      %v1697 = vcombine.low %v1688, %v1695
      %v1699 = vunpack.c.l.s4 1966171168
      %v1700 = vunpack.c.0.s8 %v1699
      %v1701 = vlaneseq
      %v1702 = vshrl.u32 %v1701, 7
      %v1703 = vsub.s32 %v1700, %v1702
      %v1704 = vrot.slane %v1696, %v1703
      %v1706 = vunpack.c.l.s4 1966171168
      %v1707 = vunpack.c.0.s8 %v1706
      %v1708 = vlaneseq
      %v1709 = vshrl.u32 %v1708, 7
      %v1710 = vsub.s32 %v1707, %v1709
      %v1711 = vrot.slane %v1697, %v1710
      %v1712 = vcombine.low %v1704, %v1711
      %v1713 = vcombine.low %v1073, %v1056
      %v1714 = vcombine.low %v1070, %v1072
      %v1715 = vcombine.low %v1097, %v1111
      %v1716 = vcombine.low %v1119, %v1121
      %v1718 = vunpack.c.l.s4 1966171168
      %v1719 = vunpack.c.0.s8 %v1718
      %v1720 = vlaneseq
      %v1721 = vshrl.u32 %v1720, 7
      %v1722 = vsub.s32 %v1719, %v1721
      %v1723 = vrot.slane %v1713, %v1722
      %v1725 = vunpack.c.l.s4 1966171168
      %v1726 = vunpack.c.0.s8 %v1725
      %v1727 = vlaneseq
      %v1728 = vshrl.u32 %v1727, 7
      %v1729 = vsub.s32 %v1726, %v1728
      %v1730 = vrot.slane %v1714, %v1729
      %v1732 = vunpack.c.l.s4 1966171168
      %v1733 = vunpack.c.0.s8 %v1732
      %v1734 = vlaneseq
      %v1735 = vshrl.u32 %v1734, 7
      %v1736 = vsub.s32 %v1733, %v1735
      %v1737 = vrot.slane %v1715, %v1736
      %v1739 = vunpack.c.l.s4 1966171168
      %v1740 = vunpack.c.0.s8 %v1739
      %v1741 = vlaneseq
      %v1742 = vshrl.u32 %v1741, 7
      %v1743 = vsub.s32 %v1740, %v1742
      %v1744 = vrot.slane %v1716, %v1743
      %v1745 = vcombine.low %v1723, %v1730
      %v1746 = vcombine.low %v1737, %v1744
      %v1748 = vunpack.c.l.s4 1966171168
      %v1749 = vunpack.c.0.s8 %v1748
      %v1750 = vlaneseq
      %v1751 = vshrl.u32 %v1750, 7
      %v1752 = vsub.s32 %v1749, %v1751
      %v1753 = vrot.slane %v1745, %v1752
      %v1755 = vunpack.c.l.s4 1966171168
      %v1756 = vunpack.c.0.s8 %v1755
      %v1757 = vlaneseq
      %v1758 = vshrl.u32 %v1757, 7
      %v1759 = vsub.s32 %v1756, %v1758
      %v1760 = vrot.slane %v1746, %v1759
      %v1761 = vcombine.low %v1753, %v1760
      %v1762 = vcombine.low %v1104, %v1118
      %v1763 = vcombine.low %v1120, %v1145
      %v1764 = vcombine.low %v1159, %v1167
      %v1765 = vcombine.low %v1169, %v1152
      %v1767 = vunpack.c.l.s4 1966171168
      %v1768 = vunpack.c.0.s8 %v1767
      %v1769 = vlaneseq
      %v1770 = vshrl.u32 %v1769, 7
      %v1771 = vsub.s32 %v1768, %v1770
      %v1772 = vrot.slane %v1762, %v1771
      %v1774 = vunpack.c.l.s4 1966171168
      %v1775 = vunpack.c.0.s8 %v1774
      %v1776 = vlaneseq
      %v1777 = vshrl.u32 %v1776, 7
      %v1778 = vsub.s32 %v1775, %v1777
      %v1779 = vrot.slane %v1763, %v1778
      %v1781 = vunpack.c.l.s4 1966171168
      %v1782 = vunpack.c.0.s8 %v1781
      %v1783 = vlaneseq
      %v1784 = vshrl.u32 %v1783, 7
      %v1785 = vsub.s32 %v1782, %v1784
      %v1786 = vrot.slane %v1764, %v1785
      %v1788 = vunpack.c.l.s4 1966171168
      %v1789 = vunpack.c.0.s8 %v1788
      %v1790 = vlaneseq
      %v1791 = vshrl.u32 %v1790, 7
      %v1792 = vsub.s32 %v1789, %v1791
      %v1793 = vrot.slane %v1765, %v1792
      %v1794 = vcombine.low %v1772, %v1779
      %v1795 = vcombine.low %v1786, %v1793
      %v1797 = vunpack.c.l.s4 1966171168
      %v1798 = vunpack.c.0.s8 %v1797
      %v1799 = vlaneseq
      %v1800 = vshrl.u32 %v1799, 7
      %v1801 = vsub.s32 %v1798, %v1800
      %v1802 = vrot.slane %v1794, %v1801
      %v1804 = vunpack.c.l.s4 1966171168
      %v1805 = vunpack.c.0.s8 %v1804
      %v1806 = vlaneseq
      %v1807 = vshrl.u32 %v1806, 7
      %v1808 = vsub.s32 %v1805, %v1807
      %v1809 = vrot.slane %v1795, %v1808
      %v1810 = vcombine.low %v1802, %v1809
      %v1811 = vcombine.low %v1166, %v1168
      %v1812 = vcombine.low %v1193, %v1207
      %v1813 = vcombine.low %v1215, %v1217
      %v1814 = vcombine.low %v1200, %v1214
      %v1816 = vunpack.c.l.s4 1966171168
      %v1817 = vunpack.c.0.s8 %v1816
      %v1818 = vlaneseq
      %v1819 = vshrl.u32 %v1818, 7
      %v1820 = vsub.s32 %v1817, %v1819
      %v1821 = vrot.slane %v1811, %v1820
      %v1823 = vunpack.c.l.s4 1966171168
      %v1824 = vunpack.c.0.s8 %v1823
      %v1825 = vlaneseq
      %v1826 = vshrl.u32 %v1825, 7
      %v1827 = vsub.s32 %v1824, %v1826
      %v1828 = vrot.slane %v1812, %v1827
      %v1830 = vunpack.c.l.s4 1966171168
      %v1831 = vunpack.c.0.s8 %v1830
      %v1832 = vlaneseq
      %v1833 = vshrl.u32 %v1832, 7
      %v1834 = vsub.s32 %v1831, %v1833
      %v1835 = vrot.slane %v1813, %v1834
      %v1837 = vunpack.c.l.s4 1966171168
      %v1838 = vunpack.c.0.s8 %v1837
      %v1839 = vlaneseq
      %v1840 = vshrl.u32 %v1839, 7
      %v1841 = vsub.s32 %v1838, %v1840
      %v1842 = vrot.slane %v1814, %v1841
      %v1843 = vcombine.low %v1821, %v1828
      %v1844 = vcombine.low %v1835, %v1842
      %v1846 = vunpack.c.l.s4 1966171168
      %v1847 = vunpack.c.0.s8 %v1846
      %v1848 = vlaneseq
      %v1849 = vshrl.u32 %v1848, 7
      %v1850 = vsub.s32 %v1847, %v1849
      %v1851 = vrot.slane %v1843, %v1850
      %v1853 = vunpack.c.l.s4 1966171168
      %v1854 = vunpack.c.0.s8 %v1853
      %v1855 = vlaneseq
      %v1856 = vshrl.u32 %v1855, 7
      %v1857 = vsub.s32 %v1854, %v1856
      %v1858 = vrot.slane %v1844, %v1857
      %v1859 = vcombine.low %v1851, %v1858
      %v1860 = vcombine.low %v1216, %v1241
      %v1861 = vcombine.low %v1255, %v1263
      %v1862 = vcombine.low %v1265, %v1248
      %v1863 = vcombine.low %v1262, %v1264
      %v1865 = vunpack.c.l.s4 1966171168
      %v1866 = vunpack.c.0.s8 %v1865
      %v1867 = vlaneseq
      %v1868 = vshrl.u32 %v1867, 7
      %v1869 = vsub.s32 %v1866, %v1868
      %v1870 = vrot.slane %v1860, %v1869
      %v1872 = vunpack.c.l.s4 1966171168
      %v1873 = vunpack.c.0.s8 %v1872
      %v1874 = vlaneseq
      %v1875 = vshrl.u32 %v1874, 7
      %v1876 = vsub.s32 %v1873, %v1875
      %v1877 = vrot.slane %v1861, %v1876
      %v1879 = vunpack.c.l.s4 1966171168
      %v1880 = vunpack.c.0.s8 %v1879
      %v1881 = vlaneseq
      %v1882 = vshrl.u32 %v1881, 7
      %v1883 = vsub.s32 %v1880, %v1882
      %v1884 = vrot.slane %v1862, %v1883
      %v1886 = vunpack.c.l.s4 1966171168
      %v1887 = vunpack.c.0.s8 %v1886
      %v1888 = vlaneseq
      %v1889 = vshrl.u32 %v1888, 7
      %v1890 = vsub.s32 %v1887, %v1889
      %v1891 = vrot.slane %v1863, %v1890
      %v1892 = vcombine.low %v1870, %v1877
      %v1893 = vcombine.low %v1884, %v1891
      %v1895 = vunpack.c.l.s4 1966171168
      %v1896 = vunpack.c.0.s8 %v1895
      %v1897 = vlaneseq
      %v1898 = vshrl.u32 %v1897, 7
      %v1899 = vsub.s32 %v1896, %v1898
      %v1900 = vrot.slane %v1892, %v1899
      %v1902 = vunpack.c.l.s4 1966171168
      %v1903 = vunpack.c.0.s8 %v1902
      %v1904 = vlaneseq
      %v1905 = vshrl.u32 %v1904, 7
      %v1906 = vsub.s32 %v1903, %v1905
      %v1907 = vrot.slane %v1893, %v1906
      %v1908 = vcombine.low %v1900, %v1907
      %v1909 = vcombine.low %v1289, %v1303
      %v1910 = vcombine.low %v1311, %v1313
      %v1911 = vcombine.low %v1296, %v1310
      %v1912 = vcombine.low %v1312, %v1337
      %v1914 = vunpack.c.l.s4 1966171168
      %v1915 = vunpack.c.0.s8 %v1914
      %v1916 = vlaneseq
      %v1917 = vshrl.u32 %v1916, 7
      %v1918 = vsub.s32 %v1915, %v1917
      %v1919 = vrot.slane %v1909, %v1918
      %v1921 = vunpack.c.l.s4 1966171168
      %v1922 = vunpack.c.0.s8 %v1921
      %v1923 = vlaneseq
      %v1924 = vshrl.u32 %v1923, 7
      %v1925 = vsub.s32 %v1922, %v1924
      %v1926 = vrot.slane %v1910, %v1925
      %v1928 = vunpack.c.l.s4 1966171168
      %v1929 = vunpack.c.0.s8 %v1928
      %v1930 = vlaneseq
      %v1931 = vshrl.u32 %v1930, 7
      %v1932 = vsub.s32 %v1929, %v1931
      %v1933 = vrot.slane %v1911, %v1932
      %v1935 = vunpack.c.l.s4 1966171168
      %v1936 = vunpack.c.0.s8 %v1935
      %v1937 = vlaneseq
      %v1938 = vshrl.u32 %v1937, 7
      %v1939 = vsub.s32 %v1936, %v1938
      %v1940 = vrot.slane %v1912, %v1939
      %v1941 = vcombine.low %v1919, %v1926
      %v1942 = vcombine.low %v1933, %v1940
      %v1944 = vunpack.c.l.s4 1966171168
      %v1945 = vunpack.c.0.s8 %v1944
      %v1946 = vlaneseq
      %v1947 = vshrl.u32 %v1946, 7
      %v1948 = vsub.s32 %v1945, %v1947
      %v1949 = vrot.slane %v1941, %v1948
      %v1951 = vunpack.c.l.s4 1966171168
      %v1952 = vunpack.c.0.s8 %v1951
      %v1953 = vlaneseq
      %v1954 = vshrl.u32 %v1953, 7
      %v1955 = vsub.s32 %v1952, %v1954
      %v1956 = vrot.slane %v1942, %v1955
      %v1957 = vcombine.low %v1949, %v1956
      %v1958 = vcombine.low %v1351, %v1359
      %v1959 = vcombine.low %v1361, %v1344
      %v1960 = vcombine.low %v1358, %v1360
      %v1961 = vcombine.low %v1385, %v1399
      %v1963 = vunpack.c.l.s4 1966171168
      %v1964 = vunpack.c.0.s8 %v1963
      %v1965 = vlaneseq
      %v1966 = vshrl.u32 %v1965, 7
      %v1967 = vsub.s32 %v1964, %v1966
      %v1968 = vrot.slane %v1958, %v1967
      %v1970 = vunpack.c.l.s4 1966171168
      %v1971 = vunpack.c.0.s8 %v1970
      %v1972 = vlaneseq
      %v1973 = vshrl.u32 %v1972, 7
      %v1974 = vsub.s32 %v1971, %v1973
      %v1975 = vrot.slane %v1959, %v1974
      %v1977 = vunpack.c.l.s4 1966171168
      %v1978 = vunpack.c.0.s8 %v1977
      %v1979 = vlaneseq
      %v1980 = vshrl.u32 %v1979, 7
      %v1981 = vsub.s32 %v1978, %v1980
      %v1982 = vrot.slane %v1960, %v1981
      %v1984 = vunpack.c.l.s4 1966171168
      %v1985 = vunpack.c.0.s8 %v1984
      %v1986 = vlaneseq
      %v1987 = vshrl.u32 %v1986, 7
      %v1988 = vsub.s32 %v1985, %v1987
      %v1989 = vrot.slane %v1961, %v1988
      %v1990 = vcombine.low %v1968, %v1975
      %v1991 = vcombine.low %v1982, %v1989
      %v1993 = vunpack.c.l.s4 1966171168
      %v1994 = vunpack.c.0.s8 %v1993
      %v1995 = vlaneseq
      %v1996 = vshrl.u32 %v1995, 7
      %v1997 = vsub.s32 %v1994, %v1996
      %v1998 = vrot.slane %v1990, %v1997
      %v2000 = vunpack.c.l.s4 1966171168
      %v2001 = vunpack.c.0.s8 %v2000
      %v2002 = vlaneseq
      %v2003 = vshrl.u32 %v2002, 7
      %v2004 = vsub.s32 %v2001, %v2003
      %v2005 = vrot.slane %v1991, %v2004
      %v2006 = vcombine.low %v1998, %v2005
      %v2007 = vcombine.low %v1407, %v1409
      %v2008 = vcombine.low %v1392, %v1406
      %v2009 = vcombine.low %v1408, %v1433
      %v2010 = vcombine.low %v1447, %v1455
      %v2012 = vunpack.c.l.s4 1966171168
      %v2013 = vunpack.c.0.s8 %v2012
      %v2014 = vlaneseq
      %v2015 = vshrl.u32 %v2014, 7
      %v2016 = vsub.s32 %v2013, %v2015
      %v2017 = vrot.slane %v2007, %v2016
      %v2019 = vunpack.c.l.s4 1966171168
      %v2020 = vunpack.c.0.s8 %v2019
      %v2021 = vlaneseq
      %v2022 = vshrl.u32 %v2021, 7
      %v2023 = vsub.s32 %v2020, %v2022
      %v2024 = vrot.slane %v2008, %v2023
      %v2026 = vunpack.c.l.s4 1966171168
      %v2027 = vunpack.c.0.s8 %v2026
      %v2028 = vlaneseq
      %v2029 = vshrl.u32 %v2028, 7
      %v2030 = vsub.s32 %v2027, %v2029
      %v2031 = vrot.slane %v2009, %v2030
      %v2033 = vunpack.c.l.s4 1966171168
      %v2034 = vunpack.c.0.s8 %v2033
      %v2035 = vlaneseq
      %v2036 = vshrl.u32 %v2035, 7
      %v2037 = vsub.s32 %v2034, %v2036
      %v2038 = vrot.slane %v2010, %v2037
      %v2039 = vcombine.low %v2017, %v2024
      %v2040 = vcombine.low %v2031, %v2038
      %v2042 = vunpack.c.l.s4 1966171168
      %v2043 = vunpack.c.0.s8 %v2042
      %v2044 = vlaneseq
      %v2045 = vshrl.u32 %v2044, 7
      %v2046 = vsub.s32 %v2043, %v2045
      %v2047 = vrot.slane %v2039, %v2046
      %v2049 = vunpack.c.l.s4 1966171168
      %v2050 = vunpack.c.0.s8 %v2049
      %v2051 = vlaneseq
      %v2052 = vshrl.u32 %v2051, 7
      %v2053 = vsub.s32 %v2050, %v2052
      %v2054 = vrot.slane %v2040, %v2053
      %v2055 = vcombine.low %v2047, %v2054
      %v2056 = vcombine.low %v1457, %v1440
      %v2057 = vcombine.low %v1454, %v1456
      %v2058 = vcombine.low %v1481, %v1495
      %v2059 = vcombine.low %v1503, %v1505
      %v2061 = vunpack.c.l.s4 1966171168
      %v2062 = vunpack.c.0.s8 %v2061
      %v2063 = vlaneseq
      %v2064 = vshrl.u32 %v2063, 7
      %v2065 = vsub.s32 %v2062, %v2064
      %v2066 = vrot.slane %v2056, %v2065
      %v2068 = vunpack.c.l.s4 1966171168
      %v2069 = vunpack.c.0.s8 %v2068
      %v2070 = vlaneseq
      %v2071 = vshrl.u32 %v2070, 7
      %v2072 = vsub.s32 %v2069, %v2071
      %v2073 = vrot.slane %v2057, %v2072
      %v2075 = vunpack.c.l.s4 1966171168
      %v2076 = vunpack.c.0.s8 %v2075
      %v2077 = vlaneseq
      %v2078 = vshrl.u32 %v2077, 7
      %v2079 = vsub.s32 %v2076, %v2078
      %v2080 = vrot.slane %v2058, %v2079
      %v2082 = vunpack.c.l.s4 1966171168
      %v2083 = vunpack.c.0.s8 %v2082
      %v2084 = vlaneseq
      %v2085 = vshrl.u32 %v2084, 7
      %v2086 = vsub.s32 %v2083, %v2085
      %v2087 = vrot.slane %v2059, %v2086
      %v2088 = vcombine.low %v2066, %v2073
      %v2089 = vcombine.low %v2080, %v2087
      %v2091 = vunpack.c.l.s4 1966171168
      %v2092 = vunpack.c.0.s8 %v2091
      %v2093 = vlaneseq
      %v2094 = vshrl.u32 %v2093, 7
      %v2095 = vsub.s32 %v2092, %v2094
      %v2096 = vrot.slane %v2088, %v2095
      %v2098 = vunpack.c.l.s4 1966171168
      %v2099 = vunpack.c.0.s8 %v2098
      %v2100 = vlaneseq
      %v2101 = vshrl.u32 %v2100, 7
      %v2102 = vsub.s32 %v2099, %v2101
      %v2103 = vrot.slane %v2089, %v2102
      %v2104 = vcombine.low %v2096, %v2103
      %v2105 = vcombine.low %v1488, %v1502
      %v2106 = vcombine.low %v1504, %v1529
      %v2107 = vcombine.low %v1543, %v1551
      %v2108 = vcombine.low %v1553, %v1536
      %v2110 = vunpack.c.l.s4 1966171168
      %v2111 = vunpack.c.0.s8 %v2110
      %v2112 = vlaneseq
      %v2113 = vshrl.u32 %v2112, 7
      %v2114 = vsub.s32 %v2111, %v2113
      %v2115 = vrot.slane %v2105, %v2114
      %v2117 = vunpack.c.l.s4 1966171168
      %v2118 = vunpack.c.0.s8 %v2117
      %v2119 = vlaneseq
      %v2120 = vshrl.u32 %v2119, 7
      %v2121 = vsub.s32 %v2118, %v2120
      %v2122 = vrot.slane %v2106, %v2121
      %v2124 = vunpack.c.l.s4 1966171168
      %v2125 = vunpack.c.0.s8 %v2124
      %v2126 = vlaneseq
      %v2127 = vshrl.u32 %v2126, 7
      %v2128 = vsub.s32 %v2125, %v2127
      %v2129 = vrot.slane %v2107, %v2128
      %v2131 = vunpack.c.l.s4 1966171168
      %v2132 = vunpack.c.0.s8 %v2131
      %v2133 = vlaneseq
      %v2134 = vshrl.u32 %v2133, 7
      %v2135 = vsub.s32 %v2132, %v2134
      %v2136 = vrot.slane %v2108, %v2135
      %v2137 = vcombine.low %v2115, %v2122
      %v2138 = vcombine.low %v2129, %v2136
      %v2140 = vunpack.c.l.s4 1966171168
      %v2141 = vunpack.c.0.s8 %v2140
      %v2142 = vlaneseq
      %v2143 = vshrl.u32 %v2142, 7
      %v2144 = vsub.s32 %v2141, %v2143
      %v2145 = vrot.slane %v2137, %v2144
      %v2147 = vunpack.c.l.s4 1966171168
      %v2148 = vunpack.c.0.s8 %v2147
      %v2149 = vlaneseq
      %v2150 = vshrl.u32 %v2149, 7
      %v2151 = vsub.s32 %v2148, %v2150
      %v2152 = vrot.slane %v2138, %v2151
      %v2153 = vcombine.low %v2145, %v2152
      %v2154 = vcombine.low %v1550, %v1552
      %v2156 = vunpack.c.l.s4 1966171168
      %v2157 = vunpack.c.0.s8 %v2156
      %v2158 = vlaneseq
      %v2159 = vshrl.u32 %v2158, 7
      %v2160 = vsub.s32 %v2157, %v2159
      %v2161 = vrot.slane %v2154, %v2160
      %v2163 = vunpack.c.l.s4 1966171168
      %v2164 = vunpack.c.0.s8 %v2163
      %v2165 = vlaneseq
      %v2166 = vshrl.u32 %v2165, 7
      %v2167 = vsub.s32 %v2164, %v2166
      %v2168 = vrot.slane %v2161, %v2167
      %v2174 = vunpack.c.l.b16 %v1554
      %v2175 = vunpack.c.l.b16 %v1555
      %v2176 = vunpack.c.l.b16 %v1556
      %v2177 = vunpack.c.l.b16 %v1557
      %v2178 = vunpack.c.l.b16 %v1558
      %v2179 = vpack.c.b16 %v2175, %v2174
      %v2180 = vpack.c.b16 %v2177, %v2176
      %v2181 = vpack.c.b16 %v2178, %v2178
      %vm2184 = vcmask 293888
      %v2186 = vsel %vm2184, %v1614, 0
      %v2189 = vsel %vm2184, %v1663, 0
      %v2192 = vsel %vm2184, %v1712, 0
      %v2195 = vsel %vm2184, %v1761, 0
      %v2198 = vsel %vm2184, %v1810, 0
      %v2201 = vsel %vm2184, %v1859, 0
      %v2204 = vsel %vm2184, %v1908, 0
      %v2207 = vsel %vm2184, %v1957, 0
      %v2210 = vsel %vm2184, %v2006, 0
      %v2213 = vsel %vm2184, %v2055, 0
      %v2216 = vsel %vm2184, %v2104, 0
      %v2219 = vsel %vm2184, %v2153, 0
      %v2222 = vsel %vm2184, %v2168, 0
      %vm2224 = vcmask 1041408
      %v2226 = vsel %vm2224, %v2181, 0
      %2228 = vmatprep.subr.bf16.mxu0 0
      %2229 = vmatpush1.bf16.msra.mxu0 0
      %2230 = vmatprep.subr.bf16.mxu0 0
      %2231 = vmatpush1.bf16.msra.mxu0 0
      %2232 = vmatprep.subr.bf16.mxu0 0
      %2233 = vmatpush1.bf16.msra.mxu0 0
      %2234 = vmatprep.subr.bf16.mxu0 0
      %2235 = vmatpush1.bf16.msra.mxu0 0
      %2236 = vmatprep.subr.bf16.mxu0 0
      %2237 = vmatpush1.bf16.msra.mxu0 0
      %2238 = vmatprep.subr.bf16.mxu0 0
      %2239 = vmatpush1.bf16.msra.mxu0 %v2226
      %2240 = vmatprep.subr.bf16.mxu0 0
      %2241 = vmatpush1.bf16.msra.mxu0 %v2180
      %2242 = vmatprep.subr.bf16.mxu0 0
      %2243 = vmatpush1.bf16.msra.mxu0 %v2179
      %2244 = vmatprep.subr.bf16.mxu0 0
      %2245 = vmatpush2.bf16.msra.mxu0 0
      %2246 = vmatprep.subr.bf16.mxu0 0
      %2247 = vmatpush2.bf16.msra.mxu0 0
      %2248 = vmatprep.subr.bf16.mxu0 0
      %2249 = vmatpush2.bf16.msra.mxu0 0
      %2250 = vmatprep.subr.bf16.mxu0 0
      %2251 = vmatpush2.bf16.msra.mxu0 0
      %2252 = vmatprep.subr.bf16.mxu0 0
      %2253 = vmatpush2.bf16.msra.mxu0 0
      %2254 = vmatprep.subr.bf16.mxu0 0
      %2255 = vmatpush2.bf16.msra.mxu0 0
      %2256 = vmatprep.subr.bf16.mxu0 0
      %2257 = vmatpush2.bf16.msra.mxu0 0
      %2258 = vmatprep.subr.bf16.mxu0 0
      %2259 = vmatpush2.bf16.msra.mxu0 0
      %2260 = vmatprep.mubr.bf16.mxu0 0
      %2261 = vmatmul.mubr.bf16.gmra.mxu0 %v2186
      %v2262 = vpop.f32.mrf.mxu0
      %v2263 = vadd.f32 %v1564, %v2262
      %v2264 = vpop.f32.mrf.mxu0
      %v2265 = vpop.f32.mrf.mxu0
      %v2266 = vadd.f32 %v1564, %v2265
      %v2267 = vpop.f32.mrf.mxu0
      %2268 = vmatprep.mubr.bf16.mxu0 0
      %2269 = vmatmul.mubr.bf16.gmra.mxu0 %v2189
      %v2270 = vpop.f32.mrf.mxu0
      %v2271 = vadd.f32 %v1564, %v2270
      %v2272 = vpop.f32.mrf.mxu0
      %v2273 = vpop.f32.mrf.mxu0
      %v2274 = vadd.f32 %v1564, %v2273
      %v2275 = vpop.f32.mrf.mxu0
      %2276 = vmatprep.mubr.bf16.mxu0 0
      %2277 = vmatmul.mubr.bf16.gmra.mxu0 %v2192
      %v2278 = vpop.f32.mrf.mxu0
      %v2279 = vadd.f32 %v1564, %v2278
      %v2280 = vpop.f32.mrf.mxu0
      %v2281 = vpop.f32.mrf.mxu0
      %v2282 = vadd.f32 %v1564, %v2281
      %v2283 = vpop.f32.mrf.mxu0
      %2284 = vmatprep.mubr.bf16.mxu0 0
      %2285 = vmatmul.mubr.bf16.gmra.mxu0 %v2195
      %v2286 = vpop.f32.mrf.mxu0
      %v2287 = vadd.f32 %v1564, %v2286
      %v2288 = vpop.f32.mrf.mxu0
      %v2289 = vpop.f32.mrf.mxu0
      %v2290 = vadd.f32 %v1564, %v2289
      %v2291 = vpop.f32.mrf.mxu0
      %2292 = vmatprep.mubr.bf16.mxu0 0
      %2293 = vmatmul.mubr.bf16.gmra.mxu0 %v2198
      %v2294 = vpop.f32.mrf.mxu0
      %v2295 = vadd.f32 %v1564, %v2294
      %v2296 = vpop.f32.mrf.mxu0
      %v2297 = vpop.f32.mrf.mxu0
      %v2298 = vadd.f32 %v1564, %v2297
      %v2299 = vpop.f32.mrf.mxu0
      %2300 = vmatprep.mubr.bf16.mxu0 0
      %2301 = vmatmul.mubr.bf16.gmra.mxu0 %v2201
      %v2302 = vpop.f32.mrf.mxu0
      %v2303 = vadd.f32 %v1564, %v2302
      %v2304 = vpop.f32.mrf.mxu0
      %v2305 = vpop.f32.mrf.mxu0
      %v2306 = vadd.f32 %v1564, %v2305
      %v2307 = vpop.f32.mrf.mxu0
      %2308 = vmatprep.mubr.bf16.mxu0 0
      %2309 = vmatmul.mubr.bf16.gmra.mxu0 %v2204
      %v2310 = vpop.f32.mrf.mxu0
      %v2311 = vadd.f32 %v1564, %v2310
      %v2312 = vpop.f32.mrf.mxu0
      %v2313 = vpop.f32.mrf.mxu0
      %v2314 = vadd.f32 %v1564, %v2313
      %v2315 = vpop.f32.mrf.mxu0
      %2316 = vmatprep.mubr.bf16.mxu0 0
      %2317 = vmatmul.mubr.bf16.gmra.mxu0 %v2207
      %v2318 = vpop.f32.mrf.mxu0
      %v2319 = vadd.f32 %v1564, %v2318
      %v2320 = vpop.f32.mrf.mxu0
      %v2321 = vpop.f32.mrf.mxu0
      %v2322 = vadd.f32 %v1564, %v2321
      %v2323 = vpop.f32.mrf.mxu0
      %2324 = vmatprep.mubr.bf16.mxu0 0
      %2325 = vmatmul.mubr.bf16.gmra.mxu0 %v2210
      %v2326 = vpop.f32.mrf.mxu0
      %v2327 = vadd.f32 %v1564, %v2326
      %v2328 = vpop.f32.mrf.mxu0
      %v2329 = vpop.f32.mrf.mxu0
      %v2330 = vadd.f32 %v1564, %v2329
      %v2331 = vpop.f32.mrf.mxu0
      %2332 = vmatprep.mubr.bf16.mxu0 0
      %2333 = vmatmul.mubr.bf16.gmra.mxu0 %v2213
      %v2334 = vpop.f32.mrf.mxu0
      %v2335 = vadd.f32 %v1564, %v2334
      %v2336 = vpop.f32.mrf.mxu0
      %v2337 = vpop.f32.mrf.mxu0
      %v2338 = vadd.f32 %v1564, %v2337
      %v2339 = vpop.f32.mrf.mxu0
      %2340 = vmatprep.mubr.bf16.mxu0 0
      %2341 = vmatmul.mubr.bf16.gmra.mxu0 %v2216
      %v2342 = vpop.f32.mrf.mxu0
      %v2343 = vadd.f32 %v1564, %v2342
      %v2344 = vpop.f32.mrf.mxu0
      %v2345 = vpop.f32.mrf.mxu0
      %v2346 = vadd.f32 %v1564, %v2345
      %v2347 = vpop.f32.mrf.mxu0
      %2348 = vmatprep.mubr.bf16.mxu0 0
      %2349 = vmatmul.mubr.bf16.gmra.mxu0 %v2219
      %v2350 = vpop.f32.mrf.mxu0
      %v2351 = vadd.f32 %v1564, %v2350
      %v2352 = vpop.f32.mrf.mxu0
      %v2353 = vpop.f32.mrf.mxu0
      %v2354 = vadd.f32 %v1564, %v2353
      %v2355 = vpop.f32.mrf.mxu0
      %2356 = vmatprep.mubr.bf16.mxu0 0
      %2357 = vmatmul.mubr.bf16.gmra.mxu0 %v2222
      %v2358 = vpop.f32.mrf.mxu0
      %v2359 = vadd.f32 %v1564, %v2358
      %v2360 = vpop.f32.mrf.mxu0
      %v2361 = vpop.f32.mrf.mxu0
      %v2362 = vpop.f32.mrf.mxu0
      %2363 = vdwg.mxu0
      %vm2364 = vcmp.ge.f32.partialorder %v2263, 0.0
      %vm2365 = vcmp.ge.f32.partialorder %v2266, 0.0
      %vm2366 = vcmp.ge.f32.partialorder %v2271, 0.0
      %vm2367 = vcmp.ge.f32.partialorder %v2274, 0.0
      %vm2368 = vcmp.ge.f32.partialorder %v2279, 0.0
      %vm2369 = vcmp.ge.f32.partialorder %v2282, 0.0
      %vm2370 = vcmp.ge.f32.partialorder %v2287, 0.0
      %vm2371 = vcmp.ge.f32.partialorder %v2290, 0.0
      %vm2372 = vcmp.ge.f32.partialorder %v2295, 0.0
      %vm2373 = vcmp.ge.f32.partialorder %v2298, 0.0
      %vm2374 = vcmp.ge.f32.partialorder %v2303, 0.0
      %vm2375 = vcmp.ge.f32.partialorder %v2306, 0.0
      %vm2376 = vcmp.ge.f32.partialorder %v2311, 0.0
      %vm2377 = vcmp.ge.f32.partialorder %v2314, 0.0
      %vm2378 = vcmp.ge.f32.partialorder %v2319, 0.0
      %vm2379 = vcmp.ge.f32.partialorder %v2322, 0.0
      %vm2380 = vcmp.ge.f32.partialorder %v2327, 0.0
      %vm2381 = vcmp.ge.f32.partialorder %v2330, 0.0
      %vm2382 = vcmp.ge.f32.partialorder %v2335, 0.0
      %vm2383 = vcmp.ge.f32.partialorder %v2338, 0.0
      %vm2384 = vcmp.ge.f32.partialorder %v2343, 0.0
      %vm2385 = vcmp.ge.f32.partialorder %v2346, 0.0
      %vm2386 = vcmp.ge.f32.partialorder %v2351, 0.0
      %vm2387 = vcmp.ge.f32.partialorder %v2354, 0.0
      %vm2388 = vcmp.ge.f32.partialorder %v2359, 0.0
      %v2389 = vmul.f32 %v2263, 0.01
      %v2390 = vmul.f32 %v2266, 0.01
      %v2391 = vmul.f32 %v2271, 0.01
      %v2392 = vmul.f32 %v2274, 0.01
      %v2393 = vmul.f32 %v2279, 0.01
      %v2394 = vmul.f32 %v2282, 0.01
      %v2395 = vmul.f32 %v2287, 0.01
      %v2396 = vmul.f32 %v2290, 0.01
      %v2397 = vmul.f32 %v2295, 0.01
      %v2398 = vmul.f32 %v2298, 0.01
      %v2399 = vmul.f32 %v2303, 0.01
      %v2400 = vmul.f32 %v2306, 0.01
      %v2401 = vmul.f32 %v2311, 0.01
      %v2402 = vmul.f32 %v2314, 0.01
      %v2403 = vmul.f32 %v2319, 0.01
      %v2404 = vmul.f32 %v2322, 0.01
      %v2405 = vmul.f32 %v2327, 0.01
      %v2406 = vmul.f32 %v2330, 0.01
      %v2407 = vmul.f32 %v2335, 0.01
      %v2408 = vmul.f32 %v2338, 0.01
      %v2409 = vmul.f32 %v2343, 0.01
      %v2410 = vmul.f32 %v2346, 0.01
      %v2411 = vmul.f32 %v2351, 0.01
      %v2412 = vmul.f32 %v2354, 0.01
      %v2413 = vmul.f32 %v2359, 0.01
      %v2414 = vsel %vm2364, %v2263, %v2389
      %v2415 = vsel %vm2365, %v2266, %v2390
      %v2416 = vsel %vm2366, %v2271, %v2391
      %v2417 = vsel %vm2367, %v2274, %v2392
      %v2418 = vsel %vm2368, %v2279, %v2393
      %v2419 = vsel %vm2369, %v2282, %v2394
      %v2420 = vsel %vm2370, %v2287, %v2395
      %v2421 = vsel %vm2371, %v2290, %v2396
      %v2422 = vsel %vm2372, %v2295, %v2397
      %v2423 = vsel %vm2373, %v2298, %v2398
      %v2424 = vsel %vm2374, %v2303, %v2399
      %v2425 = vsel %vm2375, %v2306, %v2400
      %v2426 = vsel %vm2376, %v2311, %v2401
      %v2427 = vsel %vm2377, %v2314, %v2402
      %v2428 = vsel %vm2378, %v2319, %v2403
      %v2429 = vsel %vm2379, %v2322, %v2404
      %v2430 = vsel %vm2380, %v2327, %v2405
      %v2431 = vsel %vm2381, %v2330, %v2406
      %v2432 = vsel %vm2382, %v2335, %v2407
      %v2433 = vsel %vm2383, %v2338, %v2408
      %v2434 = vsel %vm2384, %v2343, %v2409
      %v2435 = vsel %vm2385, %v2346, %v2410
      %v2436 = vsel %vm2386, %v2351, %v2411
      %v2437 = vsel %vm2387, %v2354, %v2412
      %v2438 = vsel %vm2388, %v2359, %v2413
      %v2464 = vcombine.high %v2414, %v2414
      %v2466 = vunpack.c.l.s4 1983009808
      %v2467 = vunpack.c.0.s8 %v2466
      %v2468 = vlaneseq
      %v2469 = vshrl.u32 %v2468, 7
      %v2470 = vsub.s32 %v2467, %v2469
      %v2471 = vrot.slane %v2414, %v2470
      %v2473 = vunpack.c.l.s4 1983009808
      %v2474 = vunpack.c.0.s8 %v2473
      %v2475 = vlaneseq
      %v2476 = vshrl.u32 %v2475, 7
      %v2477 = vsub.s32 %v2474, %v2476
      %v2478 = vrot.slane %v2464, %v2477
      %v2479 = vcombine.high %v2471, %v2471
      %v2480 = vcombine.high %v2478, %v2478
      %v2481 = vcombine.high %v2415, %v2415
      %v2483 = vunpack.c.l.s4 1983009808
      %v2484 = vunpack.c.0.s8 %v2483
      %v2485 = vlaneseq
      %v2486 = vshrl.u32 %v2485, 7
      %v2487 = vsub.s32 %v2484, %v2486
      %v2488 = vrot.slane %v2415, %v2487
      %v2490 = vunpack.c.l.s4 1983009808
      %v2491 = vunpack.c.0.s8 %v2490
      %v2492 = vlaneseq
      %v2493 = vshrl.u32 %v2492, 7
      %v2494 = vsub.s32 %v2491, %v2493
      %v2495 = vrot.slane %v2481, %v2494
      %v2496 = vcombine.high %v2488, %v2488
      %v2497 = vcombine.high %v2495, %v2495
      %v2498 = vcombine.high %v2416, %v2416
      %v2500 = vunpack.c.l.s4 1983009808
      %v2501 = vunpack.c.0.s8 %v2500
      %v2502 = vlaneseq
      %v2503 = vshrl.u32 %v2502, 7
      %v2504 = vsub.s32 %v2501, %v2503
      %v2505 = vrot.slane %v2416, %v2504
      %v2507 = vunpack.c.l.s4 1983009808
      %v2508 = vunpack.c.0.s8 %v2507
      %v2509 = vlaneseq
      %v2510 = vshrl.u32 %v2509, 7
      %v2511 = vsub.s32 %v2508, %v2510
      %v2512 = vrot.slane %v2498, %v2511
      %v2513 = vcombine.high %v2505, %v2505
      %v2514 = vcombine.high %v2512, %v2512
      %v2515 = vcombine.high %v2417, %v2417
      %v2517 = vunpack.c.l.s4 1983009808
      %v2518 = vunpack.c.0.s8 %v2517
      %v2519 = vlaneseq
      %v2520 = vshrl.u32 %v2519, 7
      %v2521 = vsub.s32 %v2518, %v2520
      %v2522 = vrot.slane %v2417, %v2521
      %v2524 = vunpack.c.l.s4 1983009808
      %v2525 = vunpack.c.0.s8 %v2524
      %v2526 = vlaneseq
      %v2527 = vshrl.u32 %v2526, 7
      %v2528 = vsub.s32 %v2525, %v2527
      %v2529 = vrot.slane %v2515, %v2528
      %v2530 = vcombine.high %v2522, %v2522
      %v2531 = vcombine.high %v2529, %v2529
      %v2532 = vcombine.high %v2418, %v2418
      %v2534 = vunpack.c.l.s4 1983009808
      %v2535 = vunpack.c.0.s8 %v2534
      %v2536 = vlaneseq
      %v2537 = vshrl.u32 %v2536, 7
      %v2538 = vsub.s32 %v2535, %v2537
      %v2539 = vrot.slane %v2418, %v2538
      %v2541 = vunpack.c.l.s4 1983009808
      %v2542 = vunpack.c.0.s8 %v2541
      %v2543 = vlaneseq
      %v2544 = vshrl.u32 %v2543, 7
      %v2545 = vsub.s32 %v2542, %v2544
      %v2546 = vrot.slane %v2532, %v2545
      %v2547 = vcombine.high %v2539, %v2539
      %v2548 = vcombine.high %v2546, %v2546
      %v2549 = vcombine.high %v2419, %v2419
      %v2551 = vunpack.c.l.s4 1983009808
      %v2552 = vunpack.c.0.s8 %v2551
      %v2553 = vlaneseq
      %v2554 = vshrl.u32 %v2553, 7
      %v2555 = vsub.s32 %v2552, %v2554
      %v2556 = vrot.slane %v2419, %v2555
      %v2558 = vunpack.c.l.s4 1983009808
      %v2559 = vunpack.c.0.s8 %v2558
      %v2560 = vlaneseq
      %v2561 = vshrl.u32 %v2560, 7
      %v2562 = vsub.s32 %v2559, %v2561
      %v2563 = vrot.slane %v2549, %v2562
      %v2564 = vcombine.high %v2556, %v2556
      %v2565 = vcombine.high %v2563, %v2563
      %v2566 = vcombine.high %v2420, %v2420
      %v2568 = vunpack.c.l.s4 1983009808
      %v2569 = vunpack.c.0.s8 %v2568
      %v2570 = vlaneseq
      %v2571 = vshrl.u32 %v2570, 7
      %v2572 = vsub.s32 %v2569, %v2571
      %v2573 = vrot.slane %v2420, %v2572
      %v2575 = vunpack.c.l.s4 1983009808
      %v2576 = vunpack.c.0.s8 %v2575
      %v2577 = vlaneseq
      %v2578 = vshrl.u32 %v2577, 7
      %v2579 = vsub.s32 %v2576, %v2578
      %v2580 = vrot.slane %v2566, %v2579
      %v2581 = vcombine.high %v2573, %v2573
      %v2582 = vcombine.high %v2580, %v2580
      %v2583 = vcombine.high %v2421, %v2421
      %v2585 = vunpack.c.l.s4 1983009808
      %v2586 = vunpack.c.0.s8 %v2585
      %v2587 = vlaneseq
      %v2588 = vshrl.u32 %v2587, 7
      %v2589 = vsub.s32 %v2586, %v2588
      %v2590 = vrot.slane %v2421, %v2589
      %v2592 = vunpack.c.l.s4 1983009808
      %v2593 = vunpack.c.0.s8 %v2592
      %v2594 = vlaneseq
      %v2595 = vshrl.u32 %v2594, 7
      %v2596 = vsub.s32 %v2593, %v2595
      %v2597 = vrot.slane %v2583, %v2596
      %v2598 = vcombine.high %v2590, %v2590
      %v2599 = vcombine.high %v2597, %v2597
      %v2600 = vcombine.high %v2422, %v2422
      %v2602 = vunpack.c.l.s4 1983009808
      %v2603 = vunpack.c.0.s8 %v2602
      %v2604 = vlaneseq
      %v2605 = vshrl.u32 %v2604, 7
      %v2606 = vsub.s32 %v2603, %v2605
      %v2607 = vrot.slane %v2422, %v2606
      %v2609 = vunpack.c.l.s4 1983009808
      %v2610 = vunpack.c.0.s8 %v2609
      %v2611 = vlaneseq
      %v2612 = vshrl.u32 %v2611, 7
      %v2613 = vsub.s32 %v2610, %v2612
      %v2614 = vrot.slane %v2600, %v2613
      %v2615 = vcombine.high %v2607, %v2607
      %v2616 = vcombine.high %v2614, %v2614
      %v2617 = vcombine.high %v2423, %v2423
      %v2619 = vunpack.c.l.s4 1983009808
      %v2620 = vunpack.c.0.s8 %v2619
      %v2621 = vlaneseq
      %v2622 = vshrl.u32 %v2621, 7
      %v2623 = vsub.s32 %v2620, %v2622
      %v2624 = vrot.slane %v2423, %v2623
      %v2626 = vunpack.c.l.s4 1983009808
      %v2627 = vunpack.c.0.s8 %v2626
      %v2628 = vlaneseq
      %v2629 = vshrl.u32 %v2628, 7
      %v2630 = vsub.s32 %v2627, %v2629
      %v2631 = vrot.slane %v2617, %v2630
      %v2632 = vcombine.high %v2624, %v2624
      %v2633 = vcombine.high %v2631, %v2631
      %v2634 = vcombine.high %v2424, %v2424
      %v2636 = vunpack.c.l.s4 1983009808
      %v2637 = vunpack.c.0.s8 %v2636
      %v2638 = vlaneseq
      %v2639 = vshrl.u32 %v2638, 7
      %v2640 = vsub.s32 %v2637, %v2639
      %v2641 = vrot.slane %v2424, %v2640
      %v2643 = vunpack.c.l.s4 1983009808
      %v2644 = vunpack.c.0.s8 %v2643
      %v2645 = vlaneseq
      %v2646 = vshrl.u32 %v2645, 7
      %v2647 = vsub.s32 %v2644, %v2646
      %v2648 = vrot.slane %v2634, %v2647
      %v2649 = vcombine.high %v2641, %v2641
      %v2650 = vcombine.high %v2648, %v2648
      %v2651 = vcombine.high %v2425, %v2425
      %v2653 = vunpack.c.l.s4 1983009808
      %v2654 = vunpack.c.0.s8 %v2653
      %v2655 = vlaneseq
      %v2656 = vshrl.u32 %v2655, 7
      %v2657 = vsub.s32 %v2654, %v2656
      %v2658 = vrot.slane %v2425, %v2657
      %v2660 = vunpack.c.l.s4 1983009808
      %v2661 = vunpack.c.0.s8 %v2660
      %v2662 = vlaneseq
      %v2663 = vshrl.u32 %v2662, 7
      %v2664 = vsub.s32 %v2661, %v2663
      %v2665 = vrot.slane %v2651, %v2664
      %v2666 = vcombine.high %v2658, %v2658
      %v2667 = vcombine.high %v2665, %v2665
      %v2668 = vcombine.high %v2426, %v2426
      %v2670 = vunpack.c.l.s4 1983009808
      %v2671 = vunpack.c.0.s8 %v2670
      %v2672 = vlaneseq
      %v2673 = vshrl.u32 %v2672, 7
      %v2674 = vsub.s32 %v2671, %v2673
      %v2675 = vrot.slane %v2426, %v2674
      %v2677 = vunpack.c.l.s4 1983009808
      %v2678 = vunpack.c.0.s8 %v2677
      %v2679 = vlaneseq
      %v2680 = vshrl.u32 %v2679, 7
      %v2681 = vsub.s32 %v2678, %v2680
      %v2682 = vrot.slane %v2668, %v2681
      %v2683 = vcombine.high %v2675, %v2675
      %v2684 = vcombine.high %v2682, %v2682
      %v2685 = vcombine.high %v2427, %v2427
      %v2687 = vunpack.c.l.s4 1983009808
      %v2688 = vunpack.c.0.s8 %v2687
      %v2689 = vlaneseq
      %v2690 = vshrl.u32 %v2689, 7
      %v2691 = vsub.s32 %v2688, %v2690
      %v2692 = vrot.slane %v2427, %v2691
      %v2694 = vunpack.c.l.s4 1983009808
      %v2695 = vunpack.c.0.s8 %v2694
      %v2696 = vlaneseq
      %v2697 = vshrl.u32 %v2696, 7
      %v2698 = vsub.s32 %v2695, %v2697
      %v2699 = vrot.slane %v2685, %v2698
      %v2700 = vcombine.high %v2692, %v2692
      %v2701 = vcombine.high %v2699, %v2699
      %v2702 = vcombine.high %v2428, %v2428
      %v2704 = vunpack.c.l.s4 1983009808
      %v2705 = vunpack.c.0.s8 %v2704
      %v2706 = vlaneseq
      %v2707 = vshrl.u32 %v2706, 7
      %v2708 = vsub.s32 %v2705, %v2707
      %v2709 = vrot.slane %v2428, %v2708
      %v2711 = vunpack.c.l.s4 1983009808
      %v2712 = vunpack.c.0.s8 %v2711
      %v2713 = vlaneseq
      %v2714 = vshrl.u32 %v2713, 7
      %v2715 = vsub.s32 %v2712, %v2714
      %v2716 = vrot.slane %v2702, %v2715
      %v2717 = vcombine.high %v2709, %v2709
      %v2718 = vcombine.high %v2716, %v2716
      %v2719 = vcombine.high %v2429, %v2429
      %v2721 = vunpack.c.l.s4 1983009808
      %v2722 = vunpack.c.0.s8 %v2721
      %v2723 = vlaneseq
      %v2724 = vshrl.u32 %v2723, 7
      %v2725 = vsub.s32 %v2722, %v2724
      %v2726 = vrot.slane %v2429, %v2725
      %v2728 = vunpack.c.l.s4 1983009808
      %v2729 = vunpack.c.0.s8 %v2728
      %v2730 = vlaneseq
      %v2731 = vshrl.u32 %v2730, 7
      %v2732 = vsub.s32 %v2729, %v2731
      %v2733 = vrot.slane %v2719, %v2732
      %v2734 = vcombine.high %v2726, %v2726
      %v2735 = vcombine.high %v2733, %v2733
      %v2736 = vcombine.high %v2430, %v2430
      %v2738 = vunpack.c.l.s4 1983009808
      %v2739 = vunpack.c.0.s8 %v2738
      %v2740 = vlaneseq
      %v2741 = vshrl.u32 %v2740, 7
      %v2742 = vsub.s32 %v2739, %v2741
      %v2743 = vrot.slane %v2430, %v2742
      %v2745 = vunpack.c.l.s4 1983009808
      %v2746 = vunpack.c.0.s8 %v2745
      %v2747 = vlaneseq
      %v2748 = vshrl.u32 %v2747, 7
      %v2749 = vsub.s32 %v2746, %v2748
      %v2750 = vrot.slane %v2736, %v2749
      %v2751 = vcombine.high %v2743, %v2743
      %v2752 = vcombine.high %v2750, %v2750
      %v2753 = vcombine.high %v2431, %v2431
      %v2755 = vunpack.c.l.s4 1983009808
      %v2756 = vunpack.c.0.s8 %v2755
      %v2757 = vlaneseq
      %v2758 = vshrl.u32 %v2757, 7
      %v2759 = vsub.s32 %v2756, %v2758
      %v2760 = vrot.slane %v2431, %v2759
      %v2762 = vunpack.c.l.s4 1983009808
      %v2763 = vunpack.c.0.s8 %v2762
      %v2764 = vlaneseq
      %v2765 = vshrl.u32 %v2764, 7
      %v2766 = vsub.s32 %v2763, %v2765
      %v2767 = vrot.slane %v2753, %v2766
      %v2768 = vcombine.high %v2760, %v2760
      %v2769 = vcombine.high %v2767, %v2767
      %v2770 = vcombine.high %v2432, %v2432
      %v2772 = vunpack.c.l.s4 1983009808
      %v2773 = vunpack.c.0.s8 %v2772
      %v2774 = vlaneseq
      %v2775 = vshrl.u32 %v2774, 7
      %v2776 = vsub.s32 %v2773, %v2775
      %v2777 = vrot.slane %v2432, %v2776
      %v2779 = vunpack.c.l.s4 1983009808
      %v2780 = vunpack.c.0.s8 %v2779
      %v2781 = vlaneseq
      %v2782 = vshrl.u32 %v2781, 7
      %v2783 = vsub.s32 %v2780, %v2782
      %v2784 = vrot.slane %v2770, %v2783
      %v2785 = vcombine.high %v2777, %v2777
      %v2786 = vcombine.high %v2784, %v2784
      %v2787 = vcombine.high %v2433, %v2433
      %v2789 = vunpack.c.l.s4 1983009808
      %v2790 = vunpack.c.0.s8 %v2789
      %v2791 = vlaneseq
      %v2792 = vshrl.u32 %v2791, 7
      %v2793 = vsub.s32 %v2790, %v2792
      %v2794 = vrot.slane %v2433, %v2793
      %v2796 = vunpack.c.l.s4 1983009808
      %v2797 = vunpack.c.0.s8 %v2796
      %v2798 = vlaneseq
      %v2799 = vshrl.u32 %v2798, 7
      %v2800 = vsub.s32 %v2797, %v2799
      %v2801 = vrot.slane %v2787, %v2800
      %v2802 = vcombine.high %v2794, %v2794
      %v2803 = vcombine.high %v2801, %v2801
      %v2804 = vcombine.high %v2434, %v2434
      %v2806 = vunpack.c.l.s4 1983009808
      %v2807 = vunpack.c.0.s8 %v2806
      %v2808 = vlaneseq
      %v2809 = vshrl.u32 %v2808, 7
      %v2810 = vsub.s32 %v2807, %v2809
      %v2811 = vrot.slane %v2434, %v2810
      %v2813 = vunpack.c.l.s4 1983009808
      %v2814 = vunpack.c.0.s8 %v2813
      %v2815 = vlaneseq
      %v2816 = vshrl.u32 %v2815, 7
      %v2817 = vsub.s32 %v2814, %v2816
      %v2818 = vrot.slane %v2804, %v2817
      %v2819 = vcombine.high %v2811, %v2811
      %v2820 = vcombine.high %v2818, %v2818
      %v2821 = vcombine.high %v2435, %v2435
      %v2823 = vunpack.c.l.s4 1983009808
      %v2824 = vunpack.c.0.s8 %v2823
      %v2825 = vlaneseq
      %v2826 = vshrl.u32 %v2825, 7
      %v2827 = vsub.s32 %v2824, %v2826
      %v2828 = vrot.slane %v2435, %v2827
      %v2830 = vunpack.c.l.s4 1983009808
      %v2831 = vunpack.c.0.s8 %v2830
      %v2832 = vlaneseq
      %v2833 = vshrl.u32 %v2832, 7
      %v2834 = vsub.s32 %v2831, %v2833
      %v2835 = vrot.slane %v2821, %v2834
      %v2836 = vcombine.high %v2828, %v2828
      %v2837 = vcombine.high %v2835, %v2835
      %v2838 = vcombine.high %v2436, %v2436
      %v2840 = vunpack.c.l.s4 1983009808
      %v2841 = vunpack.c.0.s8 %v2840
      %v2842 = vlaneseq
      %v2843 = vshrl.u32 %v2842, 7
      %v2844 = vsub.s32 %v2841, %v2843
      %v2845 = vrot.slane %v2436, %v2844
      %v2847 = vunpack.c.l.s4 1983009808
      %v2848 = vunpack.c.0.s8 %v2847
      %v2849 = vlaneseq
      %v2850 = vshrl.u32 %v2849, 7
      %v2851 = vsub.s32 %v2848, %v2850
      %v2852 = vrot.slane %v2838, %v2851
      %v2853 = vcombine.high %v2845, %v2845
      %v2854 = vcombine.high %v2852, %v2852
      %v2855 = vcombine.high %v2437, %v2437
      %v2857 = vunpack.c.l.s4 1983009808
      %v2858 = vunpack.c.0.s8 %v2857
      %v2859 = vlaneseq
      %v2860 = vshrl.u32 %v2859, 7
      %v2861 = vsub.s32 %v2858, %v2860
      %v2862 = vrot.slane %v2437, %v2861
      %v2864 = vunpack.c.l.s4 1983009808
      %v2865 = vunpack.c.0.s8 %v2864
      %v2866 = vlaneseq
      %v2867 = vshrl.u32 %v2866, 7
      %v2868 = vsub.s32 %v2865, %v2867
      %v2869 = vrot.slane %v2855, %v2868
      %v2870 = vcombine.high %v2862, %v2862
      %v2871 = vcombine.high %v2869, %v2869
      %v2873 = vunpack.c.l.s4 1983009808
      %v2874 = vunpack.c.0.s8 %v2873
      %v2875 = vlaneseq
      %v2876 = vshrl.u32 %v2875, 7
      %v2877 = vsub.s32 %v2874, %v2876
      %v2878 = vrot.slane %v2438, %v2877
      %v2879 = vcombine.high %v2878, %v2878
      %v2880 = vcombine.low %v2471, %v2479
      %v2881 = vcombine.low %v2478, %v2480
      %v2883 = vunpack.c.l.s4 1983009808
      %v2884 = vunpack.c.0.s8 %v2883
      %v2885 = vlaneseq
      %v2886 = vshrl.u32 %v2885, 7
      %v2887 = vsub.s32 %v2884, %v2886
      %v2888 = vrot.slane %v2880, %v2887
      %v2890 = vunpack.c.l.s4 1983009808
      %v2891 = vunpack.c.0.s8 %v2890
      %v2892 = vlaneseq
      %v2893 = vshrl.u32 %v2892, 7
      %v2894 = vsub.s32 %v2891, %v2893
      %v2895 = vrot.slane %v2881, %v2894
      %v2896 = vcombine.low %v2888, %v2895
      %v2897 = vcombine.low %v2488, %v2496
      %v2899 = vunpack.c.l.s4 1983009808
      %v2900 = vunpack.c.0.s8 %v2899
      %v2901 = vlaneseq
      %v2902 = vshrl.u32 %v2901, 7
      %v2903 = vsub.s32 %v2900, %v2902
      %v2904 = vrot.slane %v2897, %v2903
      %v2906 = vunpack.c.l.s4 1983009808
      %v2907 = vunpack.c.0.s8 %v2906
      %v2908 = vlaneseq
      %v2909 = vshrl.u32 %v2908, 7
      %v2910 = vsub.s32 %v2907, %v2909
      %v2911 = vrot.slane %v2495, %v2910
      %v2912 = vcombine.low %v2904, %v2911
      %v2913 = vcombine.low %v2497, %v2505
      %v2914 = vcombine.low %v2513, %v2512
      %v2916 = vunpack.c.l.s4 1983009808
      %v2917 = vunpack.c.0.s8 %v2916
      %v2918 = vlaneseq
      %v2919 = vshrl.u32 %v2918, 7
      %v2920 = vsub.s32 %v2917, %v2919
      %v2921 = vrot.slane %v2913, %v2920
      %v2923 = vunpack.c.l.s4 1983009808
      %v2924 = vunpack.c.0.s8 %v2923
      %v2925 = vlaneseq
      %v2926 = vshrl.u32 %v2925, 7
      %v2927 = vsub.s32 %v2924, %v2926
      %v2928 = vrot.slane %v2914, %v2927
      %v2929 = vcombine.low %v2921, %v2928
      %v2930 = vcombine.low %v2514, %v2522
      %v2932 = vunpack.c.l.s4 1983009808
      %v2933 = vunpack.c.0.s8 %v2932
      %v2934 = vlaneseq
      %v2935 = vshrl.u32 %v2934, 7
      %v2936 = vsub.s32 %v2933, %v2935
      %v2937 = vrot.slane %v2930, %v2936
      %v2939 = vunpack.c.l.s4 1983009808
      %v2940 = vunpack.c.0.s8 %v2939
      %v2941 = vlaneseq
      %v2942 = vshrl.u32 %v2941, 7
      %v2943 = vsub.s32 %v2940, %v2942
      %v2944 = vrot.slane %v2530, %v2943
      %v2945 = vcombine.low %v2937, %v2944
      %v2946 = vcombine.low %v2529, %v2531
      %v2947 = vcombine.low %v2539, %v2547
      %v2949 = vunpack.c.l.s4 1983009808
      %v2950 = vunpack.c.0.s8 %v2949
      %v2951 = vlaneseq
      %v2952 = vshrl.u32 %v2951, 7
      %v2953 = vsub.s32 %v2950, %v2952
      %v2954 = vrot.slane %v2946, %v2953
      %v2956 = vunpack.c.l.s4 1983009808
      %v2957 = vunpack.c.0.s8 %v2956
      %v2958 = vlaneseq
      %v2959 = vshrl.u32 %v2958, 7
      %v2960 = vsub.s32 %v2957, %v2959
      %v2961 = vrot.slane %v2947, %v2960
      %v2962 = vcombine.low %v2954, %v2961
      %v2963 = vcombine.low %v2546, %v2548
      %v2965 = vunpack.c.l.s4 1983009808
      %v2966 = vunpack.c.0.s8 %v2965
      %v2967 = vlaneseq
      %v2968 = vshrl.u32 %v2967, 7
      %v2969 = vsub.s32 %v2966, %v2968
      %v2970 = vrot.slane %v2963, %v2969
      %v2972 = vunpack.c.l.s4 1983009808
      %v2973 = vunpack.c.0.s8 %v2972
      %v2974 = vlaneseq
      %v2975 = vshrl.u32 %v2974, 7
      %v2976 = vsub.s32 %v2973, %v2975
      %v2977 = vrot.slane %v2556, %v2976
      %v2978 = vcombine.low %v2970, %v2977
      %v2979 = vcombine.low %v2564, %v2563
      %v2980 = vcombine.low %v2565, %v2573
      %v2982 = vunpack.c.l.s4 1983009808
      %v2983 = vunpack.c.0.s8 %v2982
      %v2984 = vlaneseq
      %v2985 = vshrl.u32 %v2984, 7
      %v2986 = vsub.s32 %v2983, %v2985
      %v2987 = vrot.slane %v2979, %v2986
      %v2989 = vunpack.c.l.s4 1983009808
      %v2990 = vunpack.c.0.s8 %v2989
      %v2991 = vlaneseq
      %v2992 = vshrl.u32 %v2991, 7
      %v2993 = vsub.s32 %v2990, %v2992
      %v2994 = vrot.slane %v2980, %v2993
      %v2995 = vcombine.low %v2987, %v2994
      %v2996 = vcombine.low %v2581, %v2580
      %v2998 = vunpack.c.l.s4 1983009808
      %v2999 = vunpack.c.0.s8 %v2998
      %v3000 = vlaneseq
      %v3001 = vshrl.u32 %v3000, 7
      %v3002 = vsub.s32 %v2999, %v3001
      %v3003 = vrot.slane %v2996, %v3002
      %v3005 = vunpack.c.l.s4 1983009808
      %v3006 = vunpack.c.0.s8 %v3005
      %v3007 = vlaneseq
      %v3008 = vshrl.u32 %v3007, 7
      %v3009 = vsub.s32 %v3006, %v3008
      %v3010 = vrot.slane %v2582, %v3009
      %v3011 = vcombine.low %v3003, %v3010
      %v3012 = vcombine.low %v2590, %v2598
      %v3013 = vcombine.low %v2597, %v2599
      %v3015 = vunpack.c.l.s4 1983009808
      %v3016 = vunpack.c.0.s8 %v3015
      %v3017 = vlaneseq
      %v3018 = vshrl.u32 %v3017, 7
      %v3019 = vsub.s32 %v3016, %v3018
      %v3020 = vrot.slane %v3012, %v3019
      %v3022 = vunpack.c.l.s4 1983009808
      %v3023 = vunpack.c.0.s8 %v3022
      %v3024 = vlaneseq
      %v3025 = vshrl.u32 %v3024, 7
      %v3026 = vsub.s32 %v3023, %v3025
      %v3027 = vrot.slane %v3013, %v3026
      %v3028 = vcombine.low %v3020, %v3027
      %v3029 = vcombine.low %v2607, %v2615
      %v3031 = vunpack.c.l.s4 1983009808
      %v3032 = vunpack.c.0.s8 %v3031
      %v3033 = vlaneseq
      %v3034 = vshrl.u32 %v3033, 7
      %v3035 = vsub.s32 %v3032, %v3034
      %v3036 = vrot.slane %v3029, %v3035
      %v3038 = vunpack.c.l.s4 1983009808
      %v3039 = vunpack.c.0.s8 %v3038
      %v3040 = vlaneseq
      %v3041 = vshrl.u32 %v3040, 7
      %v3042 = vsub.s32 %v3039, %v3041
      %v3043 = vrot.slane %v2614, %v3042
      %v3044 = vcombine.low %v3036, %v3043
      %v3045 = vcombine.low %v2616, %v2624
      %v3046 = vcombine.low %v2632, %v2631
      %v3048 = vunpack.c.l.s4 1983009808
      %v3049 = vunpack.c.0.s8 %v3048
      %v3050 = vlaneseq
      %v3051 = vshrl.u32 %v3050, 7
      %v3052 = vsub.s32 %v3049, %v3051
      %v3053 = vrot.slane %v3045, %v3052
      %v3055 = vunpack.c.l.s4 1983009808
      %v3056 = vunpack.c.0.s8 %v3055
      %v3057 = vlaneseq
      %v3058 = vshrl.u32 %v3057, 7
      %v3059 = vsub.s32 %v3056, %v3058
      %v3060 = vrot.slane %v3046, %v3059
      %v3061 = vcombine.low %v3053, %v3060
      %v3062 = vcombine.low %v2633, %v2641
      %v3064 = vunpack.c.l.s4 1983009808
      %v3065 = vunpack.c.0.s8 %v3064
      %v3066 = vlaneseq
      %v3067 = vshrl.u32 %v3066, 7
      %v3068 = vsub.s32 %v3065, %v3067
      %v3069 = vrot.slane %v3062, %v3068
      %v3071 = vunpack.c.l.s4 1983009808
      %v3072 = vunpack.c.0.s8 %v3071
      %v3073 = vlaneseq
      %v3074 = vshrl.u32 %v3073, 7
      %v3075 = vsub.s32 %v3072, %v3074
      %v3076 = vrot.slane %v2649, %v3075
      %v3077 = vcombine.low %v3069, %v3076
      %v3078 = vcombine.low %v2648, %v2650
      %v3079 = vcombine.low %v2658, %v2666
      %v3081 = vunpack.c.l.s4 1983009808
      %v3082 = vunpack.c.0.s8 %v3081
      %v3083 = vlaneseq
      %v3084 = vshrl.u32 %v3083, 7
      %v3085 = vsub.s32 %v3082, %v3084
      %v3086 = vrot.slane %v3078, %v3085
      %v3088 = vunpack.c.l.s4 1983009808
      %v3089 = vunpack.c.0.s8 %v3088
      %v3090 = vlaneseq
      %v3091 = vshrl.u32 %v3090, 7
      %v3092 = vsub.s32 %v3089, %v3091
      %v3093 = vrot.slane %v3079, %v3092
      %v3094 = vcombine.low %v3086, %v3093
      %v3095 = vcombine.low %v2665, %v2667
      %v3097 = vunpack.c.l.s4 1983009808
      %v3098 = vunpack.c.0.s8 %v3097
      %v3099 = vlaneseq
      %v3100 = vshrl.u32 %v3099, 7
      %v3101 = vsub.s32 %v3098, %v3100
      %v3102 = vrot.slane %v3095, %v3101
      %v3104 = vunpack.c.l.s4 1983009808
      %v3105 = vunpack.c.0.s8 %v3104
      %v3106 = vlaneseq
      %v3107 = vshrl.u32 %v3106, 7
      %v3108 = vsub.s32 %v3105, %v3107
      %v3109 = vrot.slane %v2675, %v3108
      %v3110 = vcombine.low %v3102, %v3109
      %v3111 = vcombine.low %v2683, %v2682
      %v3112 = vcombine.low %v2684, %v2692
      %v3114 = vunpack.c.l.s4 1983009808
      %v3115 = vunpack.c.0.s8 %v3114
      %v3116 = vlaneseq
      %v3117 = vshrl.u32 %v3116, 7
      %v3118 = vsub.s32 %v3115, %v3117
      %v3119 = vrot.slane %v3111, %v3118
      %v3121 = vunpack.c.l.s4 1983009808
      %v3122 = vunpack.c.0.s8 %v3121
      %v3123 = vlaneseq
      %v3124 = vshrl.u32 %v3123, 7
      %v3125 = vsub.s32 %v3122, %v3124
      %v3126 = vrot.slane %v3112, %v3125
      %v3127 = vcombine.low %v3119, %v3126
      %v3128 = vcombine.low %v2700, %v2699
      %v3130 = vunpack.c.l.s4 1983009808
      %v3131 = vunpack.c.0.s8 %v3130
      %v3132 = vlaneseq
      %v3133 = vshrl.u32 %v3132, 7
      %v3134 = vsub.s32 %v3131, %v3133
      %v3135 = vrot.slane %v3128, %v3134
      %v3137 = vunpack.c.l.s4 1983009808
      %v3138 = vunpack.c.0.s8 %v3137
      %v3139 = vlaneseq
      %v3140 = vshrl.u32 %v3139, 7
      %v3141 = vsub.s32 %v3138, %v3140
      %v3142 = vrot.slane %v2701, %v3141
      %v3143 = vcombine.low %v3135, %v3142
      %v3144 = vcombine.low %v2709, %v2717
      %v3145 = vcombine.low %v2716, %v2718
      %v3147 = vunpack.c.l.s4 1983009808
      %v3148 = vunpack.c.0.s8 %v3147
      %v3149 = vlaneseq
      %v3150 = vshrl.u32 %v3149, 7
      %v3151 = vsub.s32 %v3148, %v3150
      %v3152 = vrot.slane %v3144, %v3151
      %v3154 = vunpack.c.l.s4 1983009808
      %v3155 = vunpack.c.0.s8 %v3154
      %v3156 = vlaneseq
      %v3157 = vshrl.u32 %v3156, 7
      %v3158 = vsub.s32 %v3155, %v3157
      %v3159 = vrot.slane %v3145, %v3158
      %v3160 = vcombine.low %v3152, %v3159
      %v3161 = vcombine.low %v2726, %v2734
      %v3163 = vunpack.c.l.s4 1983009808
      %v3164 = vunpack.c.0.s8 %v3163
      %v3165 = vlaneseq
      %v3166 = vshrl.u32 %v3165, 7
      %v3167 = vsub.s32 %v3164, %v3166
      %v3168 = vrot.slane %v3161, %v3167
      %v3170 = vunpack.c.l.s4 1983009808
      %v3171 = vunpack.c.0.s8 %v3170
      %v3172 = vlaneseq
      %v3173 = vshrl.u32 %v3172, 7
      %v3174 = vsub.s32 %v3171, %v3173
      %v3175 = vrot.slane %v2733, %v3174
      %v3176 = vcombine.low %v3168, %v3175
      %v3177 = vcombine.low %v2735, %v2743
      %v3178 = vcombine.low %v2751, %v2750
      %v3180 = vunpack.c.l.s4 1983009808
      %v3181 = vunpack.c.0.s8 %v3180
      %v3182 = vlaneseq
      %v3183 = vshrl.u32 %v3182, 7
      %v3184 = vsub.s32 %v3181, %v3183
      %v3185 = vrot.slane %v3177, %v3184
      %v3187 = vunpack.c.l.s4 1983009808
      %v3188 = vunpack.c.0.s8 %v3187
      %v3189 = vlaneseq
      %v3190 = vshrl.u32 %v3189, 7
      %v3191 = vsub.s32 %v3188, %v3190
      %v3192 = vrot.slane %v3178, %v3191
      %v3193 = vcombine.low %v3185, %v3192
      %v3194 = vcombine.low %v2752, %v2760
      %v3196 = vunpack.c.l.s4 1983009808
      %v3197 = vunpack.c.0.s8 %v3196
      %v3198 = vlaneseq
      %v3199 = vshrl.u32 %v3198, 7
      %v3200 = vsub.s32 %v3197, %v3199
      %v3201 = vrot.slane %v3194, %v3200
      %v3203 = vunpack.c.l.s4 1983009808
      %v3204 = vunpack.c.0.s8 %v3203
      %v3205 = vlaneseq
      %v3206 = vshrl.u32 %v3205, 7
      %v3207 = vsub.s32 %v3204, %v3206
      %v3208 = vrot.slane %v2768, %v3207
      %v3209 = vcombine.low %v3201, %v3208
      %v3210 = vcombine.low %v2767, %v2769
      %v3211 = vcombine.low %v2777, %v2785
      %v3213 = vunpack.c.l.s4 1983009808
      %v3214 = vunpack.c.0.s8 %v3213
      %v3215 = vlaneseq
      %v3216 = vshrl.u32 %v3215, 7
      %v3217 = vsub.s32 %v3214, %v3216
      %v3218 = vrot.slane %v3210, %v3217
      %v3220 = vunpack.c.l.s4 1983009808
      %v3221 = vunpack.c.0.s8 %v3220
      %v3222 = vlaneseq
      %v3223 = vshrl.u32 %v3222, 7
      %v3224 = vsub.s32 %v3221, %v3223
      %v3225 = vrot.slane %v3211, %v3224
      %v3226 = vcombine.low %v3218, %v3225
      %v3227 = vcombine.low %v2784, %v2786
      %v3229 = vunpack.c.l.s4 1983009808
      %v3230 = vunpack.c.0.s8 %v3229
      %v3231 = vlaneseq
      %v3232 = vshrl.u32 %v3231, 7
      %v3233 = vsub.s32 %v3230, %v3232
      %v3234 = vrot.slane %v3227, %v3233
      %v3236 = vunpack.c.l.s4 1983009808
      %v3237 = vunpack.c.0.s8 %v3236
      %v3238 = vlaneseq
      %v3239 = vshrl.u32 %v3238, 7
      %v3240 = vsub.s32 %v3237, %v3239
      %v3241 = vrot.slane %v2794, %v3240
      %v3242 = vcombine.low %v3234, %v3241
      %v3243 = vcombine.low %v2802, %v2801
      %v3244 = vcombine.low %v2803, %v2811
      %v3246 = vunpack.c.l.s4 1983009808
      %v3247 = vunpack.c.0.s8 %v3246
      %v3248 = vlaneseq
      %v3249 = vshrl.u32 %v3248, 7
      %v3250 = vsub.s32 %v3247, %v3249
      %v3251 = vrot.slane %v3243, %v3250
      %v3253 = vunpack.c.l.s4 1983009808
      %v3254 = vunpack.c.0.s8 %v3253
      %v3255 = vlaneseq
      %v3256 = vshrl.u32 %v3255, 7
      %v3257 = vsub.s32 %v3254, %v3256
      %v3258 = vrot.slane %v3244, %v3257
      %v3259 = vcombine.low %v3251, %v3258
      %v3260 = vcombine.low %v2819, %v2818
      %v3262 = vunpack.c.l.s4 1983009808
      %v3263 = vunpack.c.0.s8 %v3262
      %v3264 = vlaneseq
      %v3265 = vshrl.u32 %v3264, 7
      %v3266 = vsub.s32 %v3263, %v3265
      %v3267 = vrot.slane %v3260, %v3266
      %v3269 = vunpack.c.l.s4 1983009808
      %v3270 = vunpack.c.0.s8 %v3269
      %v3271 = vlaneseq
      %v3272 = vshrl.u32 %v3271, 7
      %v3273 = vsub.s32 %v3270, %v3272
      %v3274 = vrot.slane %v2820, %v3273
      %v3275 = vcombine.low %v3267, %v3274
      %v3276 = vcombine.low %v2828, %v2836
      %v3277 = vcombine.low %v2835, %v2837
      %v3279 = vunpack.c.l.s4 1983009808
      %v3280 = vunpack.c.0.s8 %v3279
      %v3281 = vlaneseq
      %v3282 = vshrl.u32 %v3281, 7
      %v3283 = vsub.s32 %v3280, %v3282
      %v3284 = vrot.slane %v3276, %v3283
      %v3286 = vunpack.c.l.s4 1983009808
      %v3287 = vunpack.c.0.s8 %v3286
      %v3288 = vlaneseq
      %v3289 = vshrl.u32 %v3288, 7
      %v3290 = vsub.s32 %v3287, %v3289
      %v3291 = vrot.slane %v3277, %v3290
      %v3292 = vcombine.low %v3284, %v3291
      %v3293 = vcombine.low %v2845, %v2853
      %v3295 = vunpack.c.l.s4 1983009808
      %v3296 = vunpack.c.0.s8 %v3295
      %v3297 = vlaneseq
      %v3298 = vshrl.u32 %v3297, 7
      %v3299 = vsub.s32 %v3296, %v3298
      %v3300 = vrot.slane %v3293, %v3299
      %v3302 = vunpack.c.l.s4 1983009808
      %v3303 = vunpack.c.0.s8 %v3302
      %v3304 = vlaneseq
      %v3305 = vshrl.u32 %v3304, 7
      %v3306 = vsub.s32 %v3303, %v3305
      %v3307 = vrot.slane %v2852, %v3306
      %v3308 = vcombine.low %v3300, %v3307
      %v3309 = vcombine.low %v2854, %v2862
      %v3310 = vcombine.low %v2870, %v2869
      %v3312 = vunpack.c.l.s4 1983009808
      %v3313 = vunpack.c.0.s8 %v3312
      %v3314 = vlaneseq
      %v3315 = vshrl.u32 %v3314, 7
      %v3316 = vsub.s32 %v3313, %v3315
      %v3317 = vrot.slane %v3309, %v3316
      %v3319 = vunpack.c.l.s4 1983009808
      %v3320 = vunpack.c.0.s8 %v3319
      %v3321 = vlaneseq
      %v3322 = vshrl.u32 %v3321, 7
      %v3323 = vsub.s32 %v3320, %v3322
      %v3324 = vrot.slane %v3310, %v3323
      %v3325 = vcombine.low %v3317, %v3324
      %v3326 = vcombine.low %v2871, %v2878
      %v3328 = vunpack.c.l.s4 1983009808
      %v3329 = vunpack.c.0.s8 %v3328
      %v3330 = vlaneseq
      %v3331 = vshrl.u32 %v3330, 7
      %v3332 = vsub.s32 %v3329, %v3331
      %v3333 = vrot.slane %v3326, %v3332
      %v3335 = vunpack.c.l.s4 1983009808
      %v3336 = vunpack.c.0.s8 %v3335
      %v3337 = vlaneseq
      %v3338 = vshrl.u32 %v3337, 7
      %v3339 = vsub.s32 %v3336, %v3338
      %v3340 = vrot.slane %v2879, %v3339
      %v3341 = vcombine.low %v3333, %v3340
      %3370 = vst.msk [vmem:[%s170] sm:$0xff] %vm665, %v2896
      %vm3371 = vcmask 62464
      %3372 = vst.msk [vmem:[%s170 + $0x8] sm:$0x3f] %vm3371, %v2912
      %3373 = vst.msk [vmem:[%s170 + $0x10] sm:$0xff] %vm665, %v2929
      %3374 = vst.msk [vmem:[%s170 + $0x18] sm:$0x3f] %vm3371, %v2945
      %3375 = vst.msk [vmem:[%s170 + $0x20] sm:$0xff] %vm665, %v2962
      %3376 = vst.msk [vmem:[%s170 + $0x28] sm:$0x3f] %vm3371, %v2978
      %3377 = vst.msk [vmem:[%s170 + $0x30] sm:$0xff] %vm665, %v2995
      %3378 = vst.msk [vmem:[%s170 + $0x38] sm:$0x3f] %vm3371, %v3011
      %3379 = vst.msk [vmem:[%s170 + $0x40] sm:$0xff] %vm665, %v3028
      %3380 = vst.msk [vmem:[%s170 + $0x48] sm:$0x3f] %vm3371, %v3044
      %3381 = vst.msk [vmem:[%s170 + $0x50] sm:$0xff] %vm665, %v3061
      %3382 = vst.msk [vmem:[%s170 + $0x58] sm:$0x3f] %vm3371, %v3077
      %3383 = vst.msk [vmem:[%s170 + $0x60] sm:$0xff] %vm665, %v3094
      %3384 = vst.msk [vmem:[%s170 + $0x68] sm:$0x3f] %vm3371, %v3110
      %3385 = vst.msk [vmem:[%s170 + $0x70] sm:$0xff] %vm665, %v3127
      %3386 = vst.msk [vmem:[%s170 + $0x78] sm:$0x3f] %vm3371, %v3143
      %3387 = vst.msk [vmem:[%s170 + $0x80] sm:$0xff] %vm665, %v3160
      %3388 = vst.msk [vmem:[%s170 + $0x88] sm:$0x3f] %vm3371, %v3176
      %3389 = vst.msk [vmem:[%s170 + $0x90] sm:$0xff] %vm665, %v3193
      %3390 = vst.msk [vmem:[%s170 + $0x98] sm:$0x3f] %vm3371, %v3209
      %3391 = vst.msk [vmem:[%s170 + $0xa0] sm:$0xff] %vm665, %v3226
      %3392 = vst.msk [vmem:[%s170 + $0xa8] sm:$0x3f] %vm3371, %v3242
      %3393 = vst.msk [vmem:[%s170 + $0xb0] sm:$0xff] %vm665, %v3259
      %3394 = vst.msk [vmem:[%s170 + $0xb8] sm:$0x3f] %vm3371, %v3275
      %3395 = vst.msk [vmem:[%s170 + $0xc0] sm:$0xff] %vm665, %v3292
      %3396 = vst.msk [vmem:[%s170 + $0xc8] sm:$0x3f] %vm3371, %v3308
      %3397 = vst.msk [vmem:[%s170 + $0xd0] sm:$0xff] %vm665, %v3325
      %3398 = vst.msk [vmem:[%s170 + $0xd8] sm:$0x3f] %vm3371, %v3341
      %p3399 = scmp.lt.s32.totalorder %s14, 1
      %s3400 = scalar_select %p3399, %s14, 1
      %s3401 = smul.addr %s3400, 28
      %s3402 = smul.addr %s3401, 8
      %s3403 = scalar_lea.vmem %s3, %s3402
      // Predicated region
      $region33: #{tpu_custom_call.1} parent=31 // pred_check
        %p3404 = pneg %p100
      $region34: #{tpu_custom_call.1} parent=31 // pred_check_branch
        %3406 = sbr.rel (%p3404) target = $region36
      $region35: #{tpu_custom_call.1} parent=31 // pred_region
        _
      $region36: #{tpu_custom_call.1} parent=31 // pred_fallthru
        _
    $region32: #{tpu_custom_call.1} parent=5 // pred_fallthru
      _
    %p3407 = scmp.le.s32.totalorder 2, %s9
    // Predicated region
    $region37: #{tpu_custom_call.1} parent=5 // pred_check
      %p3408 = pneg %p3407
    $region38: #{tpu_custom_call.1} parent=5 // pred_check_branch
      %3410 = sbr.rel (%p3408) target = $region40
    $region39: #{tpu_custom_call.1} parent=5 // pred_region
      %s3411 = ssub.s32 %s9, 2
      // Predicated region
      $region41: #{tpu_custom_call.1} parent=39 // pred_check
        %p3412 = pneg %p106
      $region42: #{tpu_custom_call.1} parent=39 // pred_check_branch
        %3414 = sbr.rel (%p3412) target = $region44
      $region43: #{tpu_custom_call.1} parent=39 // pred_region
        %p3415 = scmp.lt.s32.totalorder %s15, 1
        %s3416 = scalar_select %p3415, %s15, 1
        %s3417 = smul.addr %s3416, 28
        %s3418 = smul.addr %s3417, 8
        %s3419 = scalar_lea.vmem %s3, %s3418
      $region44: #{tpu_custom_call.1} parent=39 // pred_fallthru
        _
    $region40: #{tpu_custom_call.1} parent=5 // pred_fallthru
      _
  $region6: #{tpu_custom_call.1} parent=0 // loop_footer
    %s13 = sadd.s32 1, %s9
  $region7: #{tpu_custom_call.1} parent=0 // loop_footer_branch
    %8 = sbr.rel target = $region3
  $region8: #{tpu_custom_call.1} parent=0 // loop_exit
    _

</llo_original>
